<compile_context>
chip_gen: v7x
topology: tpu7x:2x2x1
jax: 0.10.0
libtpu: 0.0.40
codegen_flags: <defaults>
</compile_context>

<pallas_src>
import jax
import jax.numpy as jnp
from jax.experimental import pallas as pl
from jax.experimental.pallas import tpu as pltpu

# ---- model constants (fixed by the PyTorch module) ----
B = 2               # batch
C_IN = 3            # input channels
L_IN = 500          # input length (required so that 6*(500-18) == 2892 for fc1)
K = 7               # conv kernel size
CH = 6              # conv channel count
CP = 8              # channels padded to one sublane group
L1, L2, L3 = 494, 488, 482
FC1_IN = CH * L3    # 2892
FC1_OUT, FC2_OUT, FC3_OUT = 16, 64, 1

# ---- lane layout ----
STRIDE = 512                              # per-batch lane stride (>= 500, lane aligned)
S0, S1, S2, S3 = 1408, 1280, 1152, 1024   # slab widths; each >= next + (K-1), lane aligned
KP = K + 1                                # taps padded to 8 (8th group has zero weights)
ONE_ROW = CP - 1                          # sublane carrying the constant-1 bias row


def _cann_kernel(x_ref, wconv_ref, wfc1_ref, misc_ref, out_ref):
    def conv(h, w_flat, w_out, relu):
        # h: (CP, w_in) f32 slab; channels on sublanes, batch packed on lanes
        # (batch b at lane offset b*STRIDE).  Sublane ONE_ROW is constant 1.0,
        # so the bias folded into w_flat column (tap 0, in-ch 7) is added by the
        # matmul itself and w_flat[7, 7] = 1 keeps the ones-row alive.
        # im2col: stack the 7 lane-shifted views (+ one zero-weighted copy to
        # pad the contraction to 64 rows), single MXU matmul, bf16 in / f32 acc.
        cols = [h[:, k:k + w_out] for k in range(K)] + [h[:, 0:w_out]]
        im = jnp.concatenate(cols, axis=0).astype(jnp.bfloat16)        # (64, w_out)
        acc = jnp.dot(w_flat, im, preferred_element_type=jnp.float32)  # (CP, w_out)
        return jnp.maximum(acc, 0.0) if relu else acc

    h0 = x_ref[...]                                   # (CP, S0) f32
    h1 = conv(h0, wconv_ref[0], S1, relu=False)       # conv1 (no relu)
    h2 = conv(h1, wconv_ref[1], S2, relu=True)        # relu(conv2)
    h3 = conv(h2, wconv_ref[2], S3, relu=True)        # relu(conv3): (CP, 1024)

    # ---- fc1: both batches fused into ONE MXU matmul ----
    # Hcat rows [b*8, b*8+8) = batch b's (CP, 512) slab.  wfc1 column c*16+j
    # holds Wf1[j, c*482+l] (channel-major flatten) and is zero for l >= 482 and
    # for c >= 6, so garbage tail lanes, the zero channel row and the ones-row
    # contribute nothing.
    hcat = jnp.concatenate(
        [h3[:, b * STRIDE:(b + 1) * STRIDE] for b in range(B)],
        axis=0).astype(jnp.bfloat16)                                    # (16, 512)
    p = jnp.dot(hcat, wfc1_ref[...], preferred_element_type=jnp.float32)  # (16, 128)

    # Extract out[b, j] = sum_c p[b*8+c, c*16+j]: mask the (row == column-group)
    # diagonal, sublane-reduce per batch, then fold the 8 lane groups of 16 with
    # log-rolls on the XLU (direction-agnostic: the orbit covers all 8 offsets).
    mask = misc_ref[0:16, :]                                            # (16, 128)
    wf2 = misc_ref[16:32, :]                                            # (16, 128)
    tail = misc_ref[32:40, :]                                           # (8, 128)

    masked = p * mask
    s = jnp.concatenate(
        [jnp.sum(masked[b * CP:(b + 1) * CP], axis=0, keepdims=True) for b in range(B)],
        axis=0)                                                         # (B, 128)
    t = s
    t = t + pltpu.roll(t, shift=64, axis=1)
    t = t + pltpu.roll(t, shift=32, axis=1)
    t = t + pltpu.roll(t, shift=16, axis=1)   # lanes j<16: sum_g s[:, g*16+j]

    z1 = jnp.maximum(t[:, :FC1_OUT] + tail[1:2, :FC1_OUT], 0.0)         # relu(fc1): (B, 16)
    z2 = jnp.dot(z1, wf2[:, :FC2_OUT], preferred_element_type=jnp.float32)
    z2 = jnp.maximum(z2 + tail[2:3, :FC2_OUT], 0.0)                     # relu(fc2): (B, 64)
    z3 = jnp.sum(z2 * tail[0:1, :FC2_OUT], axis=1, keepdims=True)       # fc3 matvec: (B, 1)
    out_ref[...] = (z3 + tail[3:4, 0:1]).astype(out_ref.dtype)          # single store


def pack_params(params):
    """One-time re-layout of the PyTorch-style parameters into 3 packed slabs."""
    (w1, b1, w2, b2, w3, b3, wf1, bf1, wf2, bf2, wf3, bf3) = params

    def conv_flat(w, b):
        co, ci, _ = w.shape
        wk = jnp.zeros((CP, KP, CP), jnp.float32)
        wk = wk.at[:co, :K, :ci].set(jnp.transpose(w, (0, 2, 1)))  # [o,k,i] = w[o,i,k]
        wk = wk.at[:co, 0, ONE_ROW].set(b)          # bias rides the constant-1 sublane
        wk = wk.at[ONE_ROW, 0, ONE_ROW].set(1.0)    # keep the ones-row alive
        return wk.reshape(CP, KP * CP)              # (8, 64); cols [56:64) stay zero

    wconv = jnp.stack([conv_flat(w1, b1), conv_flat(w2, b2), conv_flat(w3, b3)]
                      ).astype(jnp.bfloat16)                              # (3, 8, 64)

    # fc1: (16, 2892) -> (512, 128): column c*16+j holds Wf1[j, c*482+l];
    # rows l >= 482 and columns >= 96 stay zero (required by the fused extract).
    w3d = wf1.reshape(FC1_OUT, CH, L3)
    wcat = jnp.zeros((STRIDE, 128), jnp.float32)
    wcat = wcat.at[:L3, :CH * FC1_OUT].set(
        jnp.transpose(w3d, (2, 1, 0)).reshape(L3, CH * FC1_OUT))
    wcat = wcat.astype(jnp.bfloat16)                                      # (512, 128)

    # misc f32 slab: diag-extraction mask, fc2 weight, fc3 weight row, biases.
    rows = jnp.arange(2 * CP, dtype=jnp.int32) % CP
    groups = jnp.arange(128, dtype=jnp.int32) // FC1_OUT
    mask = (groups[None, :] == rows[:, None]).astype(jnp.float32)         # (16, 128)
    misc = jnp.zeros((40, 128), jnp.float32)
    misc = misc.at[0:16, :].set(mask)
    misc = misc.at[16:32, :FC2_OUT].set(wf2.T)                            # (16, 64)
    misc = misc.at[32, :FC2_OUT].set(wf3.reshape(FC2_OUT))                # fc3 weight row
    misc = misc.at[33, :FC1_OUT].set(bf1)
    misc = misc.at[34, :FC2_OUT].set(bf2)
    misc = misc.at[35, 0].set(bf3[0])
    return wconv, wcat, misc


@jax.jit
def cann_forward(x, packed):
    wconv, wcat, misc = packed
    # Per-call glue: lay the (B, 3, 500) input out as one (8, 1408) slab with
    # batch b at lane offset b*512, channels on sublanes, sublane 7 == 1.0
    # (the constant row the folded conv biases multiply).
    xp = jnp.zeros((B, CP, STRIDE), jnp.float32)
    xp = xp.at[:, :C_IN, :L_IN].set(x.astype(jnp.float32))
    xslab = jnp.transpose(xp, (1, 0, 2)).reshape(CP, B * STRIDE)
    xslab = jnp.pad(xslab, ((0, 0), (0, S0 - B * STRIDE)))
    xslab = xslab.at[ONE_ROW, :].set(1.0)

    vmem = pl.BlockSpec(memory_space=pltpu.MemorySpace.VMEM)
    # Single grid point: total work is ~0.5 MFLOP and the working set is <1 MiB,
    # so grid / megacore splitting would only add per-step overhead at B=2.
    return pl.pallas_call(
        _cann_kernel,
        out_shape=jax.ShapeDtypeStruct((B, FC3_OUT), jnp.float32),
        in_specs=[vmem] * 4,
        out_specs=vmem,
    )(xslab, wconv, wcat, misc)


def init_params(key):
    """Deterministic PyTorch-style uniform(-1/sqrt(fan_in), 1/sqrt(fan_in)) init."""
    ks = jax.random.split(key, 12)

    def u(k, shape, fan_in):
        b = 1.0 / (fan_in ** 0.5)
        return jax.random.uniform(k, shape, jnp.float32, -b, b)

    w1 = u(ks[0], (CH, C_IN, K), C_IN * K);  b1 = u(ks[1], (CH,), C_IN * K)
    w2 = u(ks[2], (CH, CH, K), CH * K);      b2 = u(ks[3], (CH,), CH * K)
    w3 = u(ks[4], (CH, CH, K), CH * K);      b3 = u(ks[5], (CH,), CH * K)
    wf1 = u(ks[6], (FC1_OUT, FC1_IN), FC1_IN);    bf1 = u(ks[7], (FC1_OUT,), FC1_IN)
    wf2 = u(ks[8], (FC2_OUT, FC1_OUT), FC1_OUT);  bf2 = u(ks[9], (FC2_OUT,), FC1_OUT)
    wf3 = u(ks[10], (FC3_OUT, FC2_OUT), FC2_OUT); bf3 = u(ks[11], (FC3_OUT,), FC2_OUT)
    return (w1, b1, w2, b2, w3, b3, wf1, bf1, wf2, bf2, wf3, bf3)


def ref_forward(x, params):
    """Pure-JAX reference matching the PyTorch forward exactly."""
    (w1, b1, w2, b2, w3, b3, wf1, bf1, wf2, bf2, wf3, bf3) = params

    def conv(h, w, b):
        y = jax.lax.conv_general_dilated(
            h, w, window_strides=(1,), padding='VALID',
            dimension_numbers=('NCH', 'OIH', 'NCH'))
        return y + b[None, :, None]

    h = conv(x, w1, b1)                       # conv1 (no relu)
    h = jax.nn.relu(conv(h, w2, b2))          # relu(conv2)
    h = jax.nn.relu(conv(h, w3, b3))          # relu(conv3)
    hf = h.reshape(h.shape[0], -1)            # (B, 2892), channel-major flatten
    z = jax.nn.relu(hf @ wf1.T + bf1)
    z = jax.nn.relu(z @ wf2.T + bf2)
    return z @ wf3.T + bf3


if __name__ == "__main__":
    key = jax.random.PRNGKey(0)
    kx, kp = jax.random.split(key)
    x = jax.random.normal(kx, (B, C_IN, L_IN), dtype=jnp.float32)
    params = init_params(kp)
    packed = pack_params(params)       # one-time parameter re-layout (hoisted out of jit)

    out = jax.block_until_ready(cann_forward(x, packed))
    ref = ref_forward(x, params)

    assert out.shape == (B, FC3_OUT), out.shape
    # bf16 MXU operands (convs + fc1) vs a default-precision f32 reference.
    assert jnp.allclose(out, ref, rtol=2e-2, atol=2e-2), (out, ref)
    print("KERNEL_OK")
</pallas_src>

<mosaic_0001>
module attributes {stable_mosaic.version = 11 : i64} {
  func.func @_cann_kernel(%arg0: memref<8x1408xf32, #tpu.memory_space<vmem>>, %arg1: memref<3x8x64xbf16, #tpu.memory_space<vmem>>, %arg2: memref<512x128xbf16, #tpu.memory_space<vmem>>, %arg3: memref<40x128xf32, #tpu.memory_space<vmem>>, %arg4: memref<2x1xf32, #tpu.memory_space<vmem>>) attributes {dimension_semantics = [], scalar_prefetch = 0 : i64, scratch_operands = 0 : i64, tpu.core_type = #tpu.core_type<tc>} {
    %c0 = arith.constant 0 : index
    %c0_0 = arith.constant 0 : index
    %0 = vector.load %arg0[%c0, %c0_0] : memref<8x1408xf32, #tpu.memory_space<vmem>>, vector<8x1408xf32>
    %c0_1 = arith.constant 0 : index
    %c0_2 = arith.constant 0 : index
    %c0_3 = arith.constant 0 : index
    %1 = vector.load %arg1[%c0_1, %c0_2, %c0_3] : memref<3x8x64xbf16, #tpu.memory_space<vmem>>, vector<1x8x64xbf16>
    %2 = vector.shape_cast %1 : vector<1x8x64xbf16> to vector<8x64xbf16>
    %3 = vector.extract_strided_slice %0 {offsets = [0, 0], sizes = [8, 1280], strides = [1, 1]} : vector<8x1408xf32> to vector<8x1280xf32>
    %4 = vector.extract_strided_slice %0 {offsets = [0, 1], sizes = [8, 1280], strides = [1, 1]} : vector<8x1408xf32> to vector<8x1280xf32>
    %5 = vector.extract_strided_slice %0 {offsets = [0, 2], sizes = [8, 1280], strides = [1, 1]} : vector<8x1408xf32> to vector<8x1280xf32>
    %6 = vector.extract_strided_slice %0 {offsets = [0, 3], sizes = [8, 1280], strides = [1, 1]} : vector<8x1408xf32> to vector<8x1280xf32>
    %7 = vector.extract_strided_slice %0 {offsets = [0, 4], sizes = [8, 1280], strides = [1, 1]} : vector<8x1408xf32> to vector<8x1280xf32>
    %8 = vector.extract_strided_slice %0 {offsets = [0, 5], sizes = [8, 1280], strides = [1, 1]} : vector<8x1408xf32> to vector<8x1280xf32>
    %9 = vector.extract_strided_slice %0 {offsets = [0, 6], sizes = [8, 1280], strides = [1, 1]} : vector<8x1408xf32> to vector<8x1280xf32>
    %10 = vector.extract_strided_slice %0 {offsets = [0, 0], sizes = [8, 1280], strides = [1, 1]} : vector<8x1408xf32> to vector<8x1280xf32>
    %11 = tpu.concatenate %3, %4, %5, %6, %7, %8, %9, %10 in 0 : vector<8x1280xf32>, vector<8x1280xf32>, vector<8x1280xf32>, vector<8x1280xf32>, vector<8x1280xf32>, vector<8x1280xf32>, vector<8x1280xf32>, vector<8x1280xf32> -> vector<64x1280xf32>
    %12 = arith.truncf %11 : vector<64x1280xf32> to vector<64x1280xbf16>
    %cst = arith.constant dense<0.000000e+00> : vector<8x1280xf32>
    %13 = tpu.matmul %2, %12, %cst {dimension_numbers = #tpu.dot_dimension_numbers<[1], [0], [0], [1], [0, 0, 1, 1], [], []>} : vector<8x64xbf16>, vector<64x1280xbf16>, vector<8x1280xf32> -> vector<8x1280xf32>
    %c1 = arith.constant 1 : index
    %c0_4 = arith.constant 0 : index
    %c0_5 = arith.constant 0 : index
    %14 = vector.load %arg1[%c1, %c0_4, %c0_5] : memref<3x8x64xbf16, #tpu.memory_space<vmem>>, vector<1x8x64xbf16>
    %15 = vector.shape_cast %14 : vector<1x8x64xbf16> to vector<8x64xbf16>
    %16 = vector.extract_strided_slice %13 {offsets = [0, 0], sizes = [8, 1152], strides = [1, 1]} : vector<8x1280xf32> to vector<8x1152xf32>
    %17 = vector.extract_strided_slice %13 {offsets = [0, 1], sizes = [8, 1152], strides = [1, 1]} : vector<8x1280xf32> to vector<8x1152xf32>
    %18 = vector.extract_strided_slice %13 {offsets = [0, 2], sizes = [8, 1152], strides = [1, 1]} : vector<8x1280xf32> to vector<8x1152xf32>
    %19 = vector.extract_strided_slice %13 {offsets = [0, 3], sizes = [8, 1152], strides = [1, 1]} : vector<8x1280xf32> to vector<8x1152xf32>
    %20 = vector.extract_strided_slice %13 {offsets = [0, 4], sizes = [8, 1152], strides = [1, 1]} : vector<8x1280xf32> to vector<8x1152xf32>
    %21 = vector.extract_strided_slice %13 {offsets = [0, 5], sizes = [8, 1152], strides = [1, 1]} : vector<8x1280xf32> to vector<8x1152xf32>
    %22 = vector.extract_strided_slice %13 {offsets = [0, 6], sizes = [8, 1152], strides = [1, 1]} : vector<8x1280xf32> to vector<8x1152xf32>
    %23 = vector.extract_strided_slice %13 {offsets = [0, 0], sizes = [8, 1152], strides = [1, 1]} : vector<8x1280xf32> to vector<8x1152xf32>
    %24 = tpu.concatenate %16, %17, %18, %19, %20, %21, %22, %23 in 0 : vector<8x1152xf32>, vector<8x1152xf32>, vector<8x1152xf32>, vector<8x1152xf32>, vector<8x1152xf32>, vector<8x1152xf32>, vector<8x1152xf32>, vector<8x1152xf32> -> vector<64x1152xf32>
    %25 = arith.truncf %24 : vector<64x1152xf32> to vector<64x1152xbf16>
    %cst_6 = arith.constant dense<0.000000e+00> : vector<8x1152xf32>
    %26 = tpu.matmul %15, %25, %cst_6 {dimension_numbers = #tpu.dot_dimension_numbers<[1], [0], [0], [1], [0, 0, 1, 1], [], []>} : vector<8x64xbf16>, vector<64x1152xbf16>, vector<8x1152xf32> -> vector<8x1152xf32>
    %cst_7 = arith.constant 0.000000e+00 : f32
    %27 = vector.broadcast %cst_7 : f32 to vector<8x1152xf32>
    %28 = arith.maximumf %26, %27 : vector<8x1152xf32>
    %c2 = arith.constant 2 : index
    %c0_8 = arith.constant 0 : index
    %c0_9 = arith.constant 0 : index
    %29 = vector.load %arg1[%c2, %c0_8, %c0_9] : memref<3x8x64xbf16, #tpu.memory_space<vmem>>, vector<1x8x64xbf16>
    %30 = vector.shape_cast %29 : vector<1x8x64xbf16> to vector<8x64xbf16>
    %31 = vector.extract_strided_slice %28 {offsets = [0, 0], sizes = [8, 1024], strides = [1, 1]} : vector<8x1152xf32> to vector<8x1024xf32>
    %32 = vector.extract_strided_slice %28 {offsets = [0, 1], sizes = [8, 1024], strides = [1, 1]} : vector<8x1152xf32> to vector<8x1024xf32>
    %33 = vector.extract_strided_slice %28 {offsets = [0, 2], sizes = [8, 1024], strides = [1, 1]} : vector<8x1152xf32> to vector<8x1024xf32>
    %34 = vector.extract_strided_slice %28 {offsets = [0, 3], sizes = [8, 1024], strides = [1, 1]} : vector<8x1152xf32> to vector<8x1024xf32>
    %35 = vector.extract_strided_slice %28 {offsets = [0, 4], sizes = [8, 1024], strides = [1, 1]} : vector<8x1152xf32> to vector<8x1024xf32>
    %36 = vector.extract_strided_slice %28 {offsets = [0, 5], sizes = [8, 1024], strides = [1, 1]} : vector<8x1152xf32> to vector<8x1024xf32>
    %37 = vector.extract_strided_slice %28 {offsets = [0, 6], sizes = [8, 1024], strides = [1, 1]} : vector<8x1152xf32> to vector<8x1024xf32>
    %38 = vector.extract_strided_slice %28 {offsets = [0, 0], sizes = [8, 1024], strides = [1, 1]} : vector<8x1152xf32> to vector<8x1024xf32>
    %39 = tpu.concatenate %31, %32, %33, %34, %35, %36, %37, %38 in 0 : vector<8x1024xf32>, vector<8x1024xf32>, vector<8x1024xf32>, vector<8x1024xf32>, vector<8x1024xf32>, vector<8x1024xf32>, vector<8x1024xf32>, vector<8x1024xf32> -> vector<64x1024xf32>
    %40 = arith.truncf %39 : vector<64x1024xf32> to vector<64x1024xbf16>
    %cst_10 = arith.constant dense<0.000000e+00> : vector<8x1024xf32>
    %41 = tpu.matmul %30, %40, %cst_10 {dimension_numbers = #tpu.dot_dimension_numbers<[1], [0], [0], [1], [0, 0, 1, 1], [], []>} : vector<8x64xbf16>, vector<64x1024xbf16>, vector<8x1024xf32> -> vector<8x1024xf32>
    %cst_11 = arith.constant 0.000000e+00 : f32
    %42 = vector.broadcast %cst_11 : f32 to vector<8x1024xf32>
    %43 = arith.maximumf %41, %42 : vector<8x1024xf32>
    %44 = vector.extract_strided_slice %43 {offsets = [0, 0], sizes = [8, 512], strides = [1, 1]} : vector<8x1024xf32> to vector<8x512xf32>
    %45 = vector.extract_strided_slice %43 {offsets = [0, 512], sizes = [8, 512], strides = [1, 1]} : vector<8x1024xf32> to vector<8x512xf32>
    %46 = tpu.concatenate %44, %45 in 0 : vector<8x512xf32>, vector<8x512xf32> -> vector<16x512xf32>
    %47 = arith.truncf %46 : vector<16x512xf32> to vector<16x512xbf16>
    %c0_12 = arith.constant 0 : index
    %c0_13 = arith.constant 0 : index
    %48 = vector.load %arg2[%c0_12, %c0_13] : memref<512x128xbf16, #tpu.memory_space<vmem>>, vector<512x128xbf16>
    %cst_14 = arith.constant dense<0.000000e+00> : vector<16x128xf32>
    %49 = tpu.matmul %47, %48, %cst_14 {dimension_numbers = #tpu.dot_dimension_numbers<[1], [0], [0], [1], [0, 0, 1, 1], [], []>} : vector<16x512xbf16>, vector<512x128xbf16>, vector<16x128xf32> -> vector<16x128xf32>
    %c0_15 = arith.constant 0 : index
    %c0_16 = arith.constant 0 : index
    %50 = vector.load %arg3[%c0_15, %c0_16] : memref<40x128xf32, #tpu.memory_space<vmem>>, vector<16x128xf32>
    %c16 = arith.constant 16 : index
    %c0_17 = arith.constant 0 : index
    %51 = vector.load %arg3[%c16, %c0_17] : memref<40x128xf32, #tpu.memory_space<vmem>>, vector<16x128xf32>
    %c32 = arith.constant 32 : index
    %c0_18 = arith.constant 0 : index
    %52 = vector.load %arg3[%c32, %c0_18] : memref<40x128xf32, #tpu.memory_space<vmem>>, vector<8x128xf32>
    %53 = arith.mulf %49, %50 : vector<16x128xf32>
    %54 = vector.extract_strided_slice %53 {offsets = [0, 0], sizes = [8, 128], strides = [1, 1]} : vector<16x128xf32> to vector<8x128xf32>
    %cst_19 = arith.constant dense<0.000000e+00> : vector<128xf32>
    %55 = vector.multi_reduction <add>, %54, %cst_19 [0] : vector<8x128xf32> to vector<128xf32>
    %56 = vector.shape_cast %55 : vector<128xf32> to vector<1x128xf32>
    %57 = vector.extract_strided_slice %53 {offsets = [8, 0], sizes = [8, 128], strides = [1, 1]} : vector<16x128xf32> to vector<8x128xf32>
    %cst_20 = arith.constant dense<0.000000e+00> : vector<128xf32>
    %58 = vector.multi_reduction <add>, %57, %cst_20 [0] : vector<8x128xf32> to vector<128xf32>
    %59 = vector.shape_cast %58 : vector<128xf32> to vector<1x128xf32>
    %60 = tpu.concatenate %56, %59 in 0 : vector<1x128xf32>, vector<1x128xf32> -> vector<2x128xf32>
    %c64_i32 = arith.constant 64 : i32
    %61 = tpu.dynamic_rotate %60 by %c64_i32 dim 1 : vector<2x128xf32>, i32 -> vector<2x128xf32>
    %62 = arith.addf %60, %61 : vector<2x128xf32>
    %c32_i32 = arith.constant 32 : i32
    %63 = tpu.dynamic_rotate %62 by %c32_i32 dim 1 : vector<2x128xf32>, i32 -> vector<2x128xf32>
    %64 = arith.addf %62, %63 : vector<2x128xf32>
    %c16_i32 = arith.constant 16 : i32
    %65 = tpu.dynamic_rotate %64 by %c16_i32 dim 1 : vector<2x128xf32>, i32 -> vector<2x128xf32>
    %66 = arith.addf %64, %65 : vector<2x128xf32>
    %67 = vector.extract_strided_slice %66 {offsets = [0, 0], sizes = [2, 16], strides = [1, 1]} : vector<2x128xf32> to vector<2x16xf32>
    %68 = vector.extract_strided_slice %52 {offsets = [1, 0], sizes = [1, 16], strides = [1, 1]} : vector<8x128xf32> to vector<1x16xf32>
    %69 = vector.broadcast %68 : vector<1x16xf32> to vector<2x16xf32>
    %70 = arith.addf %67, %69 : vector<2x16xf32>
    %cst_21 = arith.constant 0.000000e+00 : f32
    %71 = vector.broadcast %cst_21 : f32 to vector<2x16xf32>
    %72 = arith.maximumf %70, %71 : vector<2x16xf32>
    %73 = vector.extract_strided_slice %51 {offsets = [0, 0], sizes = [16, 64], strides = [1, 1]} : vector<16x128xf32> to vector<16x64xf32>
    %cst_22 = arith.constant dense<0.000000e+00> : vector<2x64xf32>
    %74 = tpu.matmul %72, %73, %cst_22 {dimension_numbers = #tpu.dot_dimension_numbers<[1], [0], [0], [1], [0, 0, 1, 1], [], []>} : vector<2x16xf32>, vector<16x64xf32>, vector<2x64xf32> -> vector<2x64xf32>
    %75 = vector.extract_strided_slice %52 {offsets = [2, 0], sizes = [1, 64], strides = [1, 1]} : vector<8x128xf32> to vector<1x64xf32>
    %76 = vector.broadcast %75 : vector<1x64xf32> to vector<2x64xf32>
    %77 = arith.addf %74, %76 : vector<2x64xf32>
    %cst_23 = arith.constant 0.000000e+00 : f32
    %78 = vector.broadcast %cst_23 : f32 to vector<2x64xf32>
    %79 = arith.maximumf %77, %78 : vector<2x64xf32>
    %80 = vector.extract_strided_slice %52 {offsets = [0, 0], sizes = [1, 64], strides = [1, 1]} : vector<8x128xf32> to vector<1x64xf32>
    %81 = vector.broadcast %80 : vector<1x64xf32> to vector<2x64xf32>
    %82 = arith.mulf %79, %81 : vector<2x64xf32>
    %cst_24 = arith.constant dense<0.000000e+00> : vector<2xf32>
    %83 = vector.multi_reduction <add>, %82, %cst_24 [1] : vector<2x64xf32> to vector<2xf32>
    %84 = vector.shape_cast %83 : vector<2xf32> to vector<2x1xf32>
    %85 = vector.extract_strided_slice %52 {offsets = [3, 0], sizes = [1, 1], strides = [1, 1]} : vector<8x128xf32> to vector<1x1xf32>
    %86 = vector.broadcast %85 : vector<1x1xf32> to vector<2x1xf32>
    %87 = arith.addf %84, %86 : vector<2x1xf32>
    %c0_25 = arith.constant 0 : index
    %c0_26 = arith.constant 0 : index
    %88 = vector.load %arg4[%c0_25, %c0_26] : memref<2x1xf32, #tpu.memory_space<vmem>>, vector<2x1xf32>
    tpu.vector_store %arg4[%c0_25, %c0_26], %87 {strides = array<i32>} : memref<2x1xf32, #tpu.memory_space<vmem>>, vector<2x1xf32>,
    return
  }
}

</mosaic_0001>

<llo_original>
// kernel: cann_forward.1
$region0: #{cann_forward.1}
  #allocation0 [shape = 'u32[]', space=smem, size = 0x4, offset = 0x4, fixed_abs, tag = 'smem constant byte address 0x4 - core index']
  #allocation1 [shape = 'u32[144,128]{1,0:T(1,128)}', space=vmem, size = 0x12000, scoped, tag = 'internal scratch']
  %s0 = inlined_call_operand.vmem [shape: f32[8,1408], index: 0, kind: input, shape index: {}]
  %s1 = inlined_call_operand.vmem [shape: bf16[3,8,64], index: 1, kind: input, shape index: {}]
  %s2 = inlined_call_operand.vmem [shape: bf16[512,128], index: 2, kind: input, shape index: {}]
  %s3 = inlined_call_operand.vmem [shape: f32[40,128], index: 3, kind: input, shape index: {}]
  %s4 = inlined_call_operand.vmem [shape: f32[2,1], index: 4, kind: output, shape index: {}]
  %s5 = sld [smem:[#allocation0]]
  $region26: #{cann_forward.1} parent=0
    _
  %s7 = ssub.s32 1, %s5
  %s8 = scalar_select 0, %s7, %s5
  // Predicated region
  $region2: #{cann_forward.1} parent=0 // pred_check
    _
  $region3: #{cann_forward.1} parent=0 // pred_check_branch
    %10 = sbr.rel (0) target = $region5
  $region4: #{cann_forward.1} parent=0 // pred_region
    _
  $region5: #{cann_forward.1} parent=0 // pred_fallthru
    _
  // Predicated region
  $region6: #{cann_forward.1} parent=0 // pred_check
    _
  $region7: #{cann_forward.1} parent=0 // pred_check_branch
    %12 = sbr.rel (0) target = $region9
  $region8: #{cann_forward.1} parent=0 // pred_region
    _
  $region9: #{cann_forward.1} parent=0 // pred_fallthru
    _
  // Predicated region
  $region10: #{cann_forward.1} parent=0 // pred_check
    _
  $region11: #{cann_forward.1} parent=0 // pred_check_branch
    %14 = sbr.rel (0) target = $region13
  $region12: #{cann_forward.1} parent=0 // pred_region
    _
  $region13: #{cann_forward.1} parent=0 // pred_fallthru
    _
  // Predicated region
  $region14: #{cann_forward.1} parent=0 // pred_check
    _
  $region15: #{cann_forward.1} parent=0 // pred_check_branch
    %16 = sbr.rel (0) target = $region17
  $region16: #{cann_forward.1} parent=0 // pred_region
    _
  $region17: #{cann_forward.1} parent=0 // pred_fallthru
    _
  %v18 = vld [vmem:[%s0] sm:$0xff]
  %v19 = vld [vmem:[%s0 + $0x8] sm:$0xff]
  %v20 = vld [vmem:[%s0 + $0x10] sm:$0xff]
  %v21 = vld [vmem:[%s0 + $0x18] sm:$0xff]
  %v22 = vld [vmem:[%s0 + $0x20] sm:$0xff]
  %v23 = vld [vmem:[%s0 + $0x28] sm:$0xff]
  %v24 = vld [vmem:[%s0 + $0x30] sm:$0xff]
  %v25 = vld [vmem:[%s0 + $0x38] sm:$0xff]
  %v26 = vld [vmem:[%s0 + $0x40] sm:$0xff]
  %v27 = vld [vmem:[%s0 + $0x48] sm:$0xff]
  %v28 = vld [vmem:[%s0 + $0x50] sm:$0xff]
  %v29 = vld [vmem:[%s1] sm:$0xf]
  %41 = vrot.lane.b32.xlu0 %v18, 127
  %v42 = vpop.permute.xlu0 %41
  %43 = vrot.lane.b32.xlu0 %v19, 127
  %v44 = vpop.permute.xlu0 %43
  %45 = vrot.lane.b32.xlu0 %v20, 127
  %v46 = vpop.permute.xlu0 %45
  %47 = vrot.lane.b32.xlu0 %v21, 127
  %v48 = vpop.permute.xlu0 %47
  %49 = vrot.lane.b32.xlu0 %v22, 127
  %v50 = vpop.permute.xlu0 %49
  %51 = vrot.lane.b32.xlu0 %v23, 127
  %v52 = vpop.permute.xlu0 %51
  %53 = vrot.lane.b32.xlu0 %v24, 127
  %v54 = vpop.permute.xlu0 %53
  %55 = vrot.lane.b32.xlu0 %v25, 127
  %v56 = vpop.permute.xlu0 %55
  %57 = vrot.lane.b32.xlu0 %v26, 127
  %v58 = vpop.permute.xlu0 %57
  %59 = vrot.lane.b32.xlu0 %v27, 127
  %v60 = vpop.permute.xlu0 %59
  %61 = vrot.lane.b32.xlu0 %v28, 127
  %v62 = vpop.permute.xlu0 %61
  %vm63 = vcmask 1039360
  %v64 = vsel %vm63, %v42, %v44
  %v65 = vsel %vm63, %v44, %v46
  %v66 = vsel %vm63, %v46, %v48
  %v67 = vsel %vm63, %v48, %v50
  %v68 = vsel %vm63, %v50, %v52
  %v69 = vsel %vm63, %v52, %v54
  %v70 = vsel %vm63, %v54, %v56
  %v71 = vsel %vm63, %v56, %v58
  %v72 = vsel %vm63, %v58, %v60
  %v73 = vsel %vm63, %v60, %v62
  %84 = vrot.lane.b32.xlu0 %v18, 126
  %v85 = vpop.permute.xlu0 %84
  %86 = vrot.lane.b32.xlu0 %v19, 126
  %v87 = vpop.permute.xlu0 %86
  %88 = vrot.lane.b32.xlu0 %v20, 126
  %v89 = vpop.permute.xlu0 %88
  %90 = vrot.lane.b32.xlu0 %v21, 126
  %v91 = vpop.permute.xlu0 %90
  %92 = vrot.lane.b32.xlu0 %v22, 126
  %v93 = vpop.permute.xlu0 %92
  %94 = vrot.lane.b32.xlu0 %v23, 126
  %v95 = vpop.permute.xlu0 %94
  %96 = vrot.lane.b32.xlu0 %v24, 126
  %v97 = vpop.permute.xlu0 %96
  %98 = vrot.lane.b32.xlu0 %v25, 126
  %v99 = vpop.permute.xlu0 %98
  %100 = vrot.lane.b32.xlu0 %v26, 126
  %v101 = vpop.permute.xlu0 %100
  %102 = vrot.lane.b32.xlu0 %v27, 126
  %v103 = vpop.permute.xlu0 %102
  %104 = vrot.lane.b32.xlu0 %v28, 126
  %v105 = vpop.permute.xlu0 %104
  %vm106 = vcmask 1031168
  %v107 = vsel %vm106, %v85, %v87
  %v108 = vsel %vm106, %v87, %v89
  %v109 = vsel %vm106, %v89, %v91
  %v110 = vsel %vm106, %v91, %v93
  %v111 = vsel %vm106, %v93, %v95
  %v112 = vsel %vm106, %v95, %v97
  %v113 = vsel %vm106, %v97, %v99
  %v114 = vsel %vm106, %v99, %v101
  %v115 = vsel %vm106, %v101, %v103
  %v116 = vsel %vm106, %v103, %v105
  %127 = vrot.lane.b32.xlu0 %v18, 125
  %v128 = vpop.permute.xlu0 %127
  %129 = vrot.lane.b32.xlu0 %v19, 125
  %v130 = vpop.permute.xlu0 %129
  %131 = vrot.lane.b32.xlu0 %v20, 125
  %v132 = vpop.permute.xlu0 %131
  %133 = vrot.lane.b32.xlu0 %v21, 125
  %v134 = vpop.permute.xlu0 %133
  %135 = vrot.lane.b32.xlu0 %v22, 125
  %v136 = vpop.permute.xlu0 %135
  %137 = vrot.lane.b32.xlu0 %v23, 125
  %v138 = vpop.permute.xlu0 %137
  %139 = vrot.lane.b32.xlu0 %v24, 125
  %v140 = vpop.permute.xlu0 %139
  %141 = vrot.lane.b32.xlu0 %v25, 125
  %v142 = vpop.permute.xlu0 %141
  %143 = vrot.lane.b32.xlu0 %v26, 125
  %v144 = vpop.permute.xlu0 %143
  %145 = vrot.lane.b32.xlu0 %v27, 125
  %v146 = vpop.permute.xlu0 %145
  %147 = vrot.lane.b32.xlu0 %v28, 125
  %v148 = vpop.permute.xlu0 %147
  %vm149 = vcmask 1022976
  %v150 = vsel %vm149, %v128, %v130
  %v151 = vsel %vm149, %v130, %v132
  %v152 = vsel %vm149, %v132, %v134
  %v153 = vsel %vm149, %v134, %v136
  %v154 = vsel %vm149, %v136, %v138
  %v155 = vsel %vm149, %v138, %v140
  %v156 = vsel %vm149, %v140, %v142
  %v157 = vsel %vm149, %v142, %v144
  %v158 = vsel %vm149, %v144, %v146
  %v159 = vsel %vm149, %v146, %v148
  %170 = vrot.lane.b32.xlu0 %v18, 124
  %v171 = vpop.permute.xlu0 %170
  %172 = vrot.lane.b32.xlu0 %v19, 124
  %v173 = vpop.permute.xlu0 %172
  %174 = vrot.lane.b32.xlu0 %v20, 124
  %v175 = vpop.permute.xlu0 %174
  %176 = vrot.lane.b32.xlu0 %v21, 124
  %v177 = vpop.permute.xlu0 %176
  %178 = vrot.lane.b32.xlu0 %v22, 124
  %v179 = vpop.permute.xlu0 %178
  %180 = vrot.lane.b32.xlu0 %v23, 124
  %v181 = vpop.permute.xlu0 %180
  %182 = vrot.lane.b32.xlu0 %v24, 124
  %v183 = vpop.permute.xlu0 %182
  %184 = vrot.lane.b32.xlu0 %v25, 124
  %v185 = vpop.permute.xlu0 %184
  %186 = vrot.lane.b32.xlu0 %v26, 124
  %v187 = vpop.permute.xlu0 %186
  %188 = vrot.lane.b32.xlu0 %v27, 124
  %v189 = vpop.permute.xlu0 %188
  %190 = vrot.lane.b32.xlu0 %v28, 124
  %v191 = vpop.permute.xlu0 %190
  %vm192 = vcmask 1014784
  %v193 = vsel %vm192, %v171, %v173
  %v194 = vsel %vm192, %v173, %v175
  %v195 = vsel %vm192, %v175, %v177
  %v196 = vsel %vm192, %v177, %v179
  %v197 = vsel %vm192, %v179, %v181
  %v198 = vsel %vm192, %v181, %v183
  %v199 = vsel %vm192, %v183, %v185
  %v200 = vsel %vm192, %v185, %v187
  %v201 = vsel %vm192, %v187, %v189
  %v202 = vsel %vm192, %v189, %v191
  %213 = vrot.lane.b32.xlu0 %v18, 123
  %v214 = vpop.permute.xlu0 %213
  %215 = vrot.lane.b32.xlu0 %v19, 123
  %v216 = vpop.permute.xlu0 %215
  %217 = vrot.lane.b32.xlu0 %v20, 123
  %v218 = vpop.permute.xlu0 %217
  %219 = vrot.lane.b32.xlu0 %v21, 123
  %v220 = vpop.permute.xlu0 %219
  %221 = vrot.lane.b32.xlu0 %v22, 123
  %v222 = vpop.permute.xlu0 %221
  %223 = vrot.lane.b32.xlu0 %v23, 123
  %v224 = vpop.permute.xlu0 %223
  %225 = vrot.lane.b32.xlu0 %v24, 123
  %v226 = vpop.permute.xlu0 %225
  %227 = vrot.lane.b32.xlu0 %v25, 123
  %v228 = vpop.permute.xlu0 %227
  %229 = vrot.lane.b32.xlu0 %v26, 123
  %v230 = vpop.permute.xlu0 %229
  %231 = vrot.lane.b32.xlu0 %v27, 123
  %v232 = vpop.permute.xlu0 %231
  %233 = vrot.lane.b32.xlu0 %v28, 123
  %v234 = vpop.permute.xlu0 %233
  %vm235 = vcmask 1006592
  %v236 = vsel %vm235, %v214, %v216
  %v237 = vsel %vm235, %v216, %v218
  %v238 = vsel %vm235, %v218, %v220
  %v239 = vsel %vm235, %v220, %v222
  %v240 = vsel %vm235, %v222, %v224
  %v241 = vsel %vm235, %v224, %v226
  %v242 = vsel %vm235, %v226, %v228
  %v243 = vsel %vm235, %v228, %v230
  %v244 = vsel %vm235, %v230, %v232
  %v245 = vsel %vm235, %v232, %v234
  %256 = vrot.lane.b32.xlu0 %v18, 122
  %v257 = vpop.permute.xlu0 %256
  %258 = vrot.lane.b32.xlu0 %v19, 122
  %v259 = vpop.permute.xlu0 %258
  %260 = vrot.lane.b32.xlu0 %v20, 122
  %v261 = vpop.permute.xlu0 %260
  %262 = vrot.lane.b32.xlu0 %v21, 122
  %v263 = vpop.permute.xlu0 %262
  %264 = vrot.lane.b32.xlu0 %v22, 122
  %v265 = vpop.permute.xlu0 %264
  %266 = vrot.lane.b32.xlu0 %v23, 122
  %v267 = vpop.permute.xlu0 %266
  %268 = vrot.lane.b32.xlu0 %v24, 122
  %v269 = vpop.permute.xlu0 %268
  %270 = vrot.lane.b32.xlu0 %v25, 122
  %v271 = vpop.permute.xlu0 %270
  %272 = vrot.lane.b32.xlu0 %v26, 122
  %v273 = vpop.permute.xlu0 %272
  %274 = vrot.lane.b32.xlu0 %v27, 122
  %v275 = vpop.permute.xlu0 %274
  %276 = vrot.lane.b32.xlu0 %v28, 122
  %v277 = vpop.permute.xlu0 %276
  %vm278 = vcmask 998400
  %v279 = vsel %vm278, %v257, %v259
  %v280 = vsel %vm278, %v259, %v261
  %v281 = vsel %vm278, %v261, %v263
  %v282 = vsel %vm278, %v263, %v265
  %v283 = vsel %vm278, %v265, %v267
  %v284 = vsel %vm278, %v267, %v269
  %v285 = vsel %vm278, %v269, %v271
  %v286 = vsel %vm278, %v271, %v273
  %v287 = vsel %vm278, %v273, %v275
  %v288 = vsel %vm278, %v275, %v277
  %v299 = vpack.c.bf16 %v64, %v18
  %v300 = vpack.c.bf16 %v65, %v19
  %v301 = vpack.c.bf16 %v66, %v20
  %v302 = vpack.c.bf16 %v67, %v21
  %v303 = vpack.c.bf16 %v68, %v22
  %v304 = vpack.c.bf16 %v69, %v23
  %v305 = vpack.c.bf16 %v70, %v24
  %v306 = vpack.c.bf16 %v71, %v25
  %v307 = vpack.c.bf16 %v72, %v26
  %v308 = vpack.c.bf16 %v73, %v27
  %v309 = vpack.c.bf16 %v150, %v107
  %v310 = vpack.c.bf16 %v151, %v108
  %v311 = vpack.c.bf16 %v152, %v109
  %v312 = vpack.c.bf16 %v153, %v110
  %v313 = vpack.c.bf16 %v154, %v111
  %v314 = vpack.c.bf16 %v155, %v112
  %v315 = vpack.c.bf16 %v156, %v113
  %v316 = vpack.c.bf16 %v157, %v114
  %v317 = vpack.c.bf16 %v158, %v115
  %v318 = vpack.c.bf16 %v159, %v116
  %v319 = vpack.c.bf16 %v236, %v193
  %v320 = vpack.c.bf16 %v237, %v194
  %v321 = vpack.c.bf16 %v238, %v195
  %v322 = vpack.c.bf16 %v239, %v196
  %v323 = vpack.c.bf16 %v240, %v197
  %v324 = vpack.c.bf16 %v241, %v198
  %v325 = vpack.c.bf16 %v242, %v199
  %v326 = vpack.c.bf16 %v243, %v200
  %v327 = vpack.c.bf16 %v244, %v201
  %v328 = vpack.c.bf16 %v245, %v202
  %v329 = vpack.c.bf16 %v18, %v279
  %v330 = vpack.c.bf16 %v19, %v280
  %v331 = vpack.c.bf16 %v20, %v281
  %v332 = vpack.c.bf16 %v21, %v282
  %v333 = vpack.c.bf16 %v22, %v283
  %v334 = vpack.c.bf16 %v23, %v284
  %v335 = vpack.c.bf16 %v24, %v285
  %v336 = vpack.c.bf16 %v25, %v286
  %v337 = vpack.c.bf16 %v26, %v287
  %v338 = vpack.c.bf16 %v27, %v288
  %vm339 = vcmask 523264
  %v341 = vsel %vm339, %v29, 0
  %343 = vmatprep.subr.bf16.mxu0 %v300
  %344 = vmatpush1.bf16.msra.mxu0 %v299
  %345 = vmatprep.subr.bf16.mxu0 %v310
  %346 = vmatpush1.bf16.msra.mxu0 %v309
  %347 = vmatprep.subr.bf16.mxu0 %v320
  %348 = vmatpush1.bf16.msra.mxu0 %v319
  %349 = vmatprep.subr.bf16.mxu0 %v330
  %350 = vmatpush1.bf16.msra.mxu0 %v329
  %351 = vmatprep.subr.bf16.mxu0 0
  %352 = vmatpush1.bf16.msra.mxu0 0
  %353 = vmatprep.subr.bf16.mxu0 0
  %354 = vmatpush1.bf16.msra.mxu0 0
  %355 = vmatprep.subr.bf16.mxu0 0
  %356 = vmatpush1.bf16.msra.mxu0 0
  %357 = vmatprep.subr.bf16.mxu0 0
  %358 = vmatpush1.bf16.msra.mxu0 0
  %359 = vmatprep.subr.bf16.mxu0 0
  %360 = vmatpush1.bf16.msra.mxu0 0
  %361 = vmatprep.subr.bf16.mxu0 0
  %362 = vmatpush1.bf16.msra.mxu0 0
  %363 = vmatprep.subr.bf16.mxu0 0
  %364 = vmatpush1.bf16.msra.mxu0 0
  %365 = vmatprep.subr.bf16.mxu0 0
  %366 = vmatpush1.bf16.msra.mxu0 0
  %367 = vmatprep.subr.bf16.mxu0 0
  %368 = vmatpush1.bf16.msra.mxu0 0
  %369 = vmatprep.subr.bf16.mxu0 0
  %370 = vmatpush1.bf16.msra.mxu0 0
  %371 = vmatprep.subr.bf16.mxu0 0
  %372 = vmatpush1.bf16.msra.mxu0 0
  %373 = vmatprep.subr.bf16.mxu0 0
  %374 = vmatpush1.bf16.msra.mxu0 0
  %375 = vmatprep.mubr.bf16.mxu0 0
  %376 = vmatmul.mubr.bf16.gmra.mrb[0].mxu0 %v341
  %v377 = vpop.f32.mrb[0].mxu0
  %v378 = vadd.f32 0.0, %v377
  %v379 = vpop.f32.mrb[0].mxu0
  %v380 = vadd.f32 0.0, %v379
  %v381 = vpop.f32.mrb[0].mxu0
  %v382 = vpop.f32.mrb[0].mxu0
  %383 = vdwg.mxu0
  %384 = vmatprep.subr.bf16.mxu0 %v302
  %385 = vmatpush1.bf16.msra.mxu0 %v301
  %386 = vmatprep.subr.bf16.mxu0 %v312
  %387 = vmatpush1.bf16.msra.mxu0 %v311
  %388 = vmatprep.subr.bf16.mxu0 %v322
  %389 = vmatpush1.bf16.msra.mxu0 %v321
  %390 = vmatprep.subr.bf16.mxu0 %v332
  %391 = vmatpush1.bf16.msra.mxu0 %v331
  %392 = vmatprep.subr.bf16.mxu0 0
  %393 = vmatpush1.bf16.msra.mxu0 0
  %394 = vmatprep.subr.bf16.mxu0 0
  %395 = vmatpush1.bf16.msra.mxu0 0
  %396 = vmatprep.subr.bf16.mxu0 0
  %397 = vmatpush1.bf16.msra.mxu0 0
  %398 = vmatprep.subr.bf16.mxu0 0
  %399 = vmatpush1.bf16.msra.mxu0 0
  %400 = vmatprep.subr.bf16.mxu0 0
  %401 = vmatpush1.bf16.msra.mxu0 0
  %402 = vmatprep.subr.bf16.mxu0 0
  %403 = vmatpush1.bf16.msra.mxu0 0
  %404 = vmatprep.subr.bf16.mxu0 0
  %405 = vmatpush1.bf16.msra.mxu0 0
  %406 = vmatprep.subr.bf16.mxu0 0
  %407 = vmatpush1.bf16.msra.mxu0 0
  %408 = vmatprep.subr.bf16.mxu0 0
  %409 = vmatpush1.bf16.msra.mxu0 0
  %410 = vmatprep.subr.bf16.mxu0 0
  %411 = vmatpush1.bf16.msra.mxu0 0
  %412 = vmatprep.subr.bf16.mxu0 0
  %413 = vmatpush1.bf16.msra.mxu0 0
  %414 = vmatprep.subr.bf16.mxu0 0
  %415 = vmatpush1.bf16.msra.mxu0 0
  %416 = vmatprep.mubr.bf16.mxu0 0
  %417 = vmatmul.mubr.bf16.gmra.mrb[0].mxu0 %v341
  %v418 = vpop.f32.mrb[0].mxu0
  %v419 = vadd.f32 0.0, %v418
  %v420 = vpop.f32.mrb[0].mxu0
  %v421 = vadd.f32 0.0, %v420
  %v422 = vpop.f32.mrb[0].mxu0
  %v423 = vpop.f32.mrb[0].mxu0
  %424 = vdwg.mxu0
  %425 = vmatprep.subr.bf16.mxu0 %v304
  %426 = vmatpush1.bf16.msra.mxu0 %v303
  %427 = vmatprep.subr.bf16.mxu0 %v314
  %428 = vmatpush1.bf16.msra.mxu0 %v313
  %429 = vmatprep.subr.bf16.mxu0 %v324
  %430 = vmatpush1.bf16.msra.mxu0 %v323
  %431 = vmatprep.subr.bf16.mxu0 %v334
  %432 = vmatpush1.bf16.msra.mxu0 %v333
  %433 = vmatprep.subr.bf16.mxu0 0
  %434 = vmatpush1.bf16.msra.mxu0 0
  %435 = vmatprep.subr.bf16.mxu0 0
  %436 = vmatpush1.bf16.msra.mxu0 0
  %437 = vmatprep.subr.bf16.mxu0 0
  %438 = vmatpush1.bf16.msra.mxu0 0
  %439 = vmatprep.subr.bf16.mxu0 0
  %440 = vmatpush1.bf16.msra.mxu0 0
  %441 = vmatprep.subr.bf16.mxu0 0
  %442 = vmatpush1.bf16.msra.mxu0 0
  %443 = vmatprep.subr.bf16.mxu0 0
  %444 = vmatpush1.bf16.msra.mxu0 0
  %445 = vmatprep.subr.bf16.mxu0 0
  %446 = vmatpush1.bf16.msra.mxu0 0
  %447 = vmatprep.subr.bf16.mxu0 0
  %448 = vmatpush1.bf16.msra.mxu0 0
  %449 = vmatprep.subr.bf16.mxu0 0
  %450 = vmatpush1.bf16.msra.mxu0 0
  %451 = vmatprep.subr.bf16.mxu0 0
  %452 = vmatpush1.bf16.msra.mxu0 0
  %453 = vmatprep.subr.bf16.mxu0 0
  %454 = vmatpush1.bf16.msra.mxu0 0
  %455 = vmatprep.subr.bf16.mxu0 0
  %456 = vmatpush1.bf16.msra.mxu0 0
  %457 = vmatprep.mubr.bf16.mxu0 0
  %458 = vmatmul.mubr.bf16.gmra.mrb[0].mxu0 %v341
  %v459 = vpop.f32.mrb[0].mxu0
  %v460 = vadd.f32 0.0, %v459
  %v461 = vpop.f32.mrb[0].mxu0
  %v462 = vadd.f32 0.0, %v461
  %v463 = vpop.f32.mrb[0].mxu0
  %v464 = vpop.f32.mrb[0].mxu0
  %465 = vdwg.mxu0
  %466 = vmatprep.subr.bf16.mxu0 %v306
  %467 = vmatpush1.bf16.msra.mxu0 %v305
  %468 = vmatprep.subr.bf16.mxu0 %v316
  %469 = vmatpush1.bf16.msra.mxu0 %v315
  %470 = vmatprep.subr.bf16.mxu0 %v326
  %471 = vmatpush1.bf16.msra.mxu0 %v325
  %472 = vmatprep.subr.bf16.mxu0 %v336
  %473 = vmatpush1.bf16.msra.mxu0 %v335
  %474 = vmatprep.subr.bf16.mxu0 0
  %475 = vmatpush1.bf16.msra.mxu0 0
  %476 = vmatprep.subr.bf16.mxu0 0
  %477 = vmatpush1.bf16.msra.mxu0 0
  %478 = vmatprep.subr.bf16.mxu0 0
  %479 = vmatpush1.bf16.msra.mxu0 0
  %480 = vmatprep.subr.bf16.mxu0 0
  %481 = vmatpush1.bf16.msra.mxu0 0
  %482 = vmatprep.subr.bf16.mxu0 0
  %483 = vmatpush1.bf16.msra.mxu0 0
  %484 = vmatprep.subr.bf16.mxu0 0
  %485 = vmatpush1.bf16.msra.mxu0 0
  %486 = vmatprep.subr.bf16.mxu0 0
  %487 = vmatpush1.bf16.msra.mxu0 0
  %488 = vmatprep.subr.bf16.mxu0 0
  %489 = vmatpush1.bf16.msra.mxu0 0
  %490 = vmatprep.subr.bf16.mxu0 0
  %491 = vmatpush1.bf16.msra.mxu0 0
  %492 = vmatprep.subr.bf16.mxu0 0
  %493 = vmatpush1.bf16.msra.mxu0 0
  %494 = vmatprep.subr.bf16.mxu0 0
  %495 = vmatpush1.bf16.msra.mxu0 0
  %496 = vmatprep.subr.bf16.mxu0 0
  %497 = vmatpush1.bf16.msra.mxu0 0
  %498 = vmatprep.mubr.bf16.mxu0 0
  %499 = vmatmul.mubr.bf16.gmra.mrb[0].mxu0 %v341
  %v500 = vpop.f32.mrb[0].mxu0
  %v501 = vadd.f32 0.0, %v500
  %v502 = vpop.f32.mrb[0].mxu0
  %v503 = vadd.f32 0.0, %v502
  %v504 = vpop.f32.mrb[0].mxu0
  %v505 = vpop.f32.mrb[0].mxu0
  %506 = vdwg.mxu0
  %507 = vmatprep.subr.bf16.mxu0 %v308
  %508 = vmatpush1.bf16.msra.mxu0 %v307
  %509 = vmatprep.subr.bf16.mxu0 %v318
  %510 = vmatpush1.bf16.msra.mxu0 %v317
  %511 = vmatprep.subr.bf16.mxu0 %v328
  %512 = vmatpush1.bf16.msra.mxu0 %v327
  %513 = vmatprep.subr.bf16.mxu0 %v338
  %514 = vmatpush1.bf16.msra.mxu0 %v337
  %515 = vmatprep.subr.bf16.mxu0 0
  %516 = vmatpush1.bf16.msra.mxu0 0
  %517 = vmatprep.subr.bf16.mxu0 0
  %518 = vmatpush1.bf16.msra.mxu0 0
  %519 = vmatprep.subr.bf16.mxu0 0
  %520 = vmatpush1.bf16.msra.mxu0 0
  %521 = vmatprep.subr.bf16.mxu0 0
  %522 = vmatpush1.bf16.msra.mxu0 0
  %523 = vmatprep.subr.bf16.mxu0 0
  %524 = vmatpush1.bf16.msra.mxu0 0
  %525 = vmatprep.subr.bf16.mxu0 0
  %526 = vmatpush1.bf16.msra.mxu0 0
  %527 = vmatprep.subr.bf16.mxu0 0
  %528 = vmatpush1.bf16.msra.mxu0 0
  %529 = vmatprep.subr.bf16.mxu0 0
  %530 = vmatpush1.bf16.msra.mxu0 0
  %531 = vmatprep.subr.bf16.mxu0 0
  %532 = vmatpush1.bf16.msra.mxu0 0
  %533 = vmatprep.subr.bf16.mxu0 0
  %534 = vmatpush1.bf16.msra.mxu0 0
  %535 = vmatprep.subr.bf16.mxu0 0
  %536 = vmatpush1.bf16.msra.mxu0 0
  %537 = vmatprep.subr.bf16.mxu0 0
  %538 = vmatpush1.bf16.msra.mxu0 0
  %539 = vmatprep.mubr.bf16.mxu0 0
  %540 = vmatmul.mubr.bf16.gmra.mrb[0].mxu0 %v341
  %v541 = vpop.f32.mrb[0].mxu0
  %v542 = vadd.f32 0.0, %v541
  %v543 = vpop.f32.mrb[0].mxu0
  %v544 = vadd.f32 0.0, %v543
  %v545 = vpop.f32.mrb[0].mxu0
  %v546 = vpop.f32.mrb[0].mxu0
  %547 = vdwg.mxu0
  %s548 = scalar_lea.vmem %s1, 4
  %v549 = vld [vmem:[%s548] sm:$0xf]
  %560 = vrot.lane.b32.xlu0 %v378, 127
  %v561 = vpop.permute.xlu0 %560
  %562 = vrot.lane.b32.xlu0 %v380, 127
  %v563 = vpop.permute.xlu0 %562
  %564 = vrot.lane.b32.xlu0 %v419, 127
  %v565 = vpop.permute.xlu0 %564
  %566 = vrot.lane.b32.xlu0 %v421, 127
  %v567 = vpop.permute.xlu0 %566
  %568 = vrot.lane.b32.xlu0 %v460, 127
  %v569 = vpop.permute.xlu0 %568
  %570 = vrot.lane.b32.xlu0 %v462, 127
  %v571 = vpop.permute.xlu0 %570
  %572 = vrot.lane.b32.xlu0 %v501, 127
  %v573 = vpop.permute.xlu0 %572
  %574 = vrot.lane.b32.xlu0 %v503, 127
  %v575 = vpop.permute.xlu0 %574
  %576 = vrot.lane.b32.xlu0 %v542, 127
  %v577 = vpop.permute.xlu0 %576
  %578 = vrot.lane.b32.xlu0 %v544, 127
  %v579 = vpop.permute.xlu0 %578
  %v580 = vsel %vm63, %v561, %v563
  %v581 = vsel %vm63, %v563, %v565
  %v582 = vsel %vm63, %v565, %v567
  %v583 = vsel %vm63, %v567, %v569
  %v584 = vsel %vm63, %v569, %v571
  %v585 = vsel %vm63, %v571, %v573
  %v586 = vsel %vm63, %v573, %v575
  %v587 = vsel %vm63, %v575, %v577
  %v588 = vsel %vm63, %v577, %v579
  %598 = vrot.lane.b32.xlu0 %v378, 126
  %v599 = vpop.permute.xlu0 %598
  %600 = vrot.lane.b32.xlu0 %v380, 126
  %v601 = vpop.permute.xlu0 %600
  %602 = vrot.lane.b32.xlu0 %v419, 126
  %v603 = vpop.permute.xlu0 %602
  %604 = vrot.lane.b32.xlu0 %v421, 126
  %v605 = vpop.permute.xlu0 %604
  %606 = vrot.lane.b32.xlu0 %v460, 126
  %v607 = vpop.permute.xlu0 %606
  %608 = vrot.lane.b32.xlu0 %v462, 126
  %v609 = vpop.permute.xlu0 %608
  %610 = vrot.lane.b32.xlu0 %v501, 126
  %v611 = vpop.permute.xlu0 %610
  %612 = vrot.lane.b32.xlu0 %v503, 126
  %v613 = vpop.permute.xlu0 %612
  %614 = vrot.lane.b32.xlu0 %v542, 126
  %v615 = vpop.permute.xlu0 %614
  %616 = vrot.lane.b32.xlu0 %v544, 126
  %v617 = vpop.permute.xlu0 %616
  %v618 = vsel %vm106, %v599, %v601
  %v619 = vsel %vm106, %v601, %v603
  %v620 = vsel %vm106, %v603, %v605
  %v621 = vsel %vm106, %v605, %v607
  %v622 = vsel %vm106, %v607, %v609
  %v623 = vsel %vm106, %v609, %v611
  %v624 = vsel %vm106, %v611, %v613
  %v625 = vsel %vm106, %v613, %v615
  %v626 = vsel %vm106, %v615, %v617
  %636 = vrot.lane.b32.xlu0 %v378, 125
  %v637 = vpop.permute.xlu0 %636
  %638 = vrot.lane.b32.xlu0 %v380, 125
  %v639 = vpop.permute.xlu0 %638
  %640 = vrot.lane.b32.xlu0 %v419, 125
  %v641 = vpop.permute.xlu0 %640
  %642 = vrot.lane.b32.xlu0 %v421, 125
  %v643 = vpop.permute.xlu0 %642
  %644 = vrot.lane.b32.xlu0 %v460, 125
  %v645 = vpop.permute.xlu0 %644
  %646 = vrot.lane.b32.xlu0 %v462, 125
  %v647 = vpop.permute.xlu0 %646
  %648 = vrot.lane.b32.xlu0 %v501, 125
  %v649 = vpop.permute.xlu0 %648
  %650 = vrot.lane.b32.xlu0 %v503, 125
  %v651 = vpop.permute.xlu0 %650
  %652 = vrot.lane.b32.xlu0 %v542, 125
  %v653 = vpop.permute.xlu0 %652
  %654 = vrot.lane.b32.xlu0 %v544, 125
  %v655 = vpop.permute.xlu0 %654
  %v656 = vsel %vm149, %v637, %v639
  %v657 = vsel %vm149, %v639, %v641
  %v658 = vsel %vm149, %v641, %v643
  %v659 = vsel %vm149, %v643, %v645
  %v660 = vsel %vm149, %v645, %v647
  %v661 = vsel %vm149, %v647, %v649
  %v662 = vsel %vm149, %v649, %v651
  %v663 = vsel %vm149, %v651, %v653
  %v664 = vsel %vm149, %v653, %v655
  %674 = vrot.lane.b32.xlu0 %v378, 124
  %v675 = vpop.permute.xlu0 %674
  %676 = vrot.lane.b32.xlu0 %v380, 124
  %v677 = vpop.permute.xlu0 %676
  %678 = vrot.lane.b32.xlu0 %v419, 124
  %v679 = vpop.permute.xlu0 %678
  %680 = vrot.lane.b32.xlu0 %v421, 124
  %v681 = vpop.permute.xlu0 %680
  %682 = vrot.lane.b32.xlu0 %v460, 124
  %v683 = vpop.permute.xlu0 %682
  %684 = vrot.lane.b32.xlu0 %v462, 124
  %v685 = vpop.permute.xlu0 %684
  %686 = vrot.lane.b32.xlu0 %v501, 124
  %v687 = vpop.permute.xlu0 %686
  %688 = vrot.lane.b32.xlu0 %v503, 124
  %v689 = vpop.permute.xlu0 %688
  %690 = vrot.lane.b32.xlu0 %v542, 124
  %v691 = vpop.permute.xlu0 %690
  %692 = vrot.lane.b32.xlu0 %v544, 124
  %v693 = vpop.permute.xlu0 %692
  %v694 = vsel %vm192, %v675, %v677
  %v695 = vsel %vm192, %v677, %v679
  %v696 = vsel %vm192, %v679, %v681
  %v697 = vsel %vm192, %v681, %v683
  %v698 = vsel %vm192, %v683, %v685
  %v699 = vsel %vm192, %v685, %v687
  %v700 = vsel %vm192, %v687, %v689
  %v701 = vsel %vm192, %v689, %v691
  %v702 = vsel %vm192, %v691, %v693
  %712 = vrot.lane.b32.xlu0 %v378, 123
  %v713 = vpop.permute.xlu0 %712
  %714 = vrot.lane.b32.xlu0 %v380, 123
  %v715 = vpop.permute.xlu0 %714
  %716 = vrot.lane.b32.xlu0 %v419, 123
  %v717 = vpop.permute.xlu0 %716
  %718 = vrot.lane.b32.xlu0 %v421, 123
  %v719 = vpop.permute.xlu0 %718
  %720 = vrot.lane.b32.xlu0 %v460, 123
  %v721 = vpop.permute.xlu0 %720
  %722 = vrot.lane.b32.xlu0 %v462, 123
  %v723 = vpop.permute.xlu0 %722
  %724 = vrot.lane.b32.xlu0 %v501, 123
  %v725 = vpop.permute.xlu0 %724
  %726 = vrot.lane.b32.xlu0 %v503, 123
  %v727 = vpop.permute.xlu0 %726
  %728 = vrot.lane.b32.xlu0 %v542, 123
  %v729 = vpop.permute.xlu0 %728
  %730 = vrot.lane.b32.xlu0 %v544, 123
  %v731 = vpop.permute.xlu0 %730
  %v732 = vsel %vm235, %v713, %v715
  %v733 = vsel %vm235, %v715, %v717
  %v734 = vsel %vm235, %v717, %v719
  %v735 = vsel %vm235, %v719, %v721
  %v736 = vsel %vm235, %v721, %v723
  %v737 = vsel %vm235, %v723, %v725
  %v738 = vsel %vm235, %v725, %v727
  %v739 = vsel %vm235, %v727, %v729
  %v740 = vsel %vm235, %v729, %v731
  %750 = vrot.lane.b32.xlu0 %v378, 122
  %v751 = vpop.permute.xlu0 %750
  %752 = vrot.lane.b32.xlu0 %v380, 122
  %v753 = vpop.permute.xlu0 %752
  %754 = vrot.lane.b32.xlu0 %v419, 122
  %v755 = vpop.permute.xlu0 %754
  %756 = vrot.lane.b32.xlu0 %v421, 122
  %v757 = vpop.permute.xlu0 %756
  %758 = vrot.lane.b32.xlu0 %v460, 122
  %v759 = vpop.permute.xlu0 %758
  %760 = vrot.lane.b32.xlu0 %v462, 122
  %v761 = vpop.permute.xlu0 %760
  %762 = vrot.lane.b32.xlu0 %v501, 122
  %v763 = vpop.permute.xlu0 %762
  %764 = vrot.lane.b32.xlu0 %v503, 122
  %v765 = vpop.permute.xlu0 %764
  %766 = vrot.lane.b32.xlu0 %v542, 122
  %v767 = vpop.permute.xlu0 %766
  %768 = vrot.lane.b32.xlu0 %v544, 122
  %v769 = vpop.permute.xlu0 %768
  %v770 = vsel %vm278, %v751, %v753
  %v771 = vsel %vm278, %v753, %v755
  %v772 = vsel %vm278, %v755, %v757
  %v773 = vsel %vm278, %v757, %v759
  %v774 = vsel %vm278, %v759, %v761
  %v775 = vsel %vm278, %v761, %v763
  %v776 = vsel %vm278, %v763, %v765
  %v777 = vsel %vm278, %v765, %v767
  %v778 = vsel %vm278, %v767, %v769
  %v788 = vpack.c.bf16 %v580, %v378
  %v789 = vpack.c.bf16 %v581, %v380
  %v790 = vpack.c.bf16 %v582, %v419
  %v791 = vpack.c.bf16 %v583, %v421
  %v792 = vpack.c.bf16 %v584, %v460
  %v793 = vpack.c.bf16 %v585, %v462
  %v794 = vpack.c.bf16 %v586, %v501
  %v795 = vpack.c.bf16 %v587, %v503
  %v796 = vpack.c.bf16 %v588, %v542
  %v797 = vpack.c.bf16 %v656, %v618
  %v798 = vpack.c.bf16 %v657, %v619
  %v799 = vpack.c.bf16 %v658, %v620
  %v800 = vpack.c.bf16 %v659, %v621
  %v801 = vpack.c.bf16 %v660, %v622
  %v802 = vpack.c.bf16 %v661, %v623
  %v803 = vpack.c.bf16 %v662, %v624
  %v804 = vpack.c.bf16 %v663, %v625
  %v805 = vpack.c.bf16 %v664, %v626
  %v806 = vpack.c.bf16 %v732, %v694
  %v807 = vpack.c.bf16 %v733, %v695
  %v808 = vpack.c.bf16 %v734, %v696
  %v809 = vpack.c.bf16 %v735, %v697
  %v810 = vpack.c.bf16 %v736, %v698
  %v811 = vpack.c.bf16 %v737, %v699
  %v812 = vpack.c.bf16 %v738, %v700
  %v813 = vpack.c.bf16 %v739, %v701
  %v814 = vpack.c.bf16 %v740, %v702
  %v815 = vpack.c.bf16 %v378, %v770
  %v816 = vpack.c.bf16 %v380, %v771
  %v817 = vpack.c.bf16 %v419, %v772
  %v818 = vpack.c.bf16 %v421, %v773
  %v819 = vpack.c.bf16 %v460, %v774
  %v820 = vpack.c.bf16 %v462, %v775
  %v821 = vpack.c.bf16 %v501, %v776
  %v822 = vpack.c.bf16 %v503, %v777
  %v823 = vpack.c.bf16 %v542, %v778
  %v825 = vsel %vm339, %v549, 0
  %827 = vmatprep.subr.bf16.mxu0 %v789
  %828 = vmatpush1.bf16.msra.mxu0 %v788
  %829 = vmatprep.subr.bf16.mxu0 %v798
  %830 = vmatpush1.bf16.msra.mxu0 %v797
  %831 = vmatprep.subr.bf16.mxu0 %v807
  %832 = vmatpush1.bf16.msra.mxu0 %v806
  %833 = vmatprep.subr.bf16.mxu0 %v816
  %834 = vmatpush1.bf16.msra.mxu0 %v815
  %835 = vmatprep.subr.bf16.mxu0 0
  %836 = vmatpush1.bf16.msra.mxu0 0
  %837 = vmatprep.subr.bf16.mxu0 0
  %838 = vmatpush1.bf16.msra.mxu0 0
  %839 = vmatprep.subr.bf16.mxu0 0
  %840 = vmatpush1.bf16.msra.mxu0 0
  %841 = vmatprep.subr.bf16.mxu0 0
  %842 = vmatpush1.bf16.msra.mxu0 0
  %843 = vmatprep.subr.bf16.mxu0 0
  %844 = vmatpush1.bf16.msra.mxu0 0
  %845 = vmatprep.subr.bf16.mxu0 0
  %846 = vmatpush1.bf16.msra.mxu0 0
  %847 = vmatprep.subr.bf16.mxu0 0
  %848 = vmatpush1.bf16.msra.mxu0 0
  %849 = vmatprep.subr.bf16.mxu0 0
  %850 = vmatpush1.bf16.msra.mxu0 0
  %851 = vmatprep.subr.bf16.mxu0 0
  %852 = vmatpush1.bf16.msra.mxu0 0
  %853 = vmatprep.subr.bf16.mxu0 0
  %854 = vmatpush1.bf16.msra.mxu0 0
  %855 = vmatprep.subr.bf16.mxu0 0
  %856 = vmatpush1.bf16.msra.mxu0 0
  %857 = vmatprep.subr.bf16.mxu0 0
  %858 = vmatpush1.bf16.msra.mxu0 0
  %859 = vmatprep.mubr.bf16.mxu0 0
  %860 = vmatmul.mubr.bf16.gmra.mrb[0].mxu0 %v825
  %v861 = vpop.f32.mrb[0].mxu0
  %v862 = vadd.f32 0.0, %v861
  %v863 = vpop.f32.mrb[0].mxu0
  %v864 = vadd.f32 0.0, %v863
  %v865 = vpop.f32.mrb[0].mxu0
  %v866 = vpop.f32.mrb[0].mxu0
  %867 = vdwg.mxu0
  %868 = vmatprep.subr.bf16.mxu0 %v791
  %869 = vmatpush1.bf16.msra.mxu0 %v790
  %870 = vmatprep.subr.bf16.mxu0 %v800
  %871 = vmatpush1.bf16.msra.mxu0 %v799
  %872 = vmatprep.subr.bf16.mxu0 %v809
  %873 = vmatpush1.bf16.msra.mxu0 %v808
  %874 = vmatprep.subr.bf16.mxu0 %v818
  %875 = vmatpush1.bf16.msra.mxu0 %v817
  %876 = vmatprep.subr.bf16.mxu0 0
  %877 = vmatpush1.bf16.msra.mxu0 0
  %878 = vmatprep.subr.bf16.mxu0 0
  %879 = vmatpush1.bf16.msra.mxu0 0
  %880 = vmatprep.subr.bf16.mxu0 0
  %881 = vmatpush1.bf16.msra.mxu0 0
  %882 = vmatprep.subr.bf16.mxu0 0
  %883 = vmatpush1.bf16.msra.mxu0 0
  %884 = vmatprep.subr.bf16.mxu0 0
  %885 = vmatpush1.bf16.msra.mxu0 0
  %886 = vmatprep.subr.bf16.mxu0 0
  %887 = vmatpush1.bf16.msra.mxu0 0
  %888 = vmatprep.subr.bf16.mxu0 0
  %889 = vmatpush1.bf16.msra.mxu0 0
  %890 = vmatprep.subr.bf16.mxu0 0
  %891 = vmatpush1.bf16.msra.mxu0 0
  %892 = vmatprep.subr.bf16.mxu0 0
  %893 = vmatpush1.bf16.msra.mxu0 0
  %894 = vmatprep.subr.bf16.mxu0 0
  %895 = vmatpush1.bf16.msra.mxu0 0
  %896 = vmatprep.subr.bf16.mxu0 0
  %897 = vmatpush1.bf16.msra.mxu0 0
  %898 = vmatprep.subr.bf16.mxu0 0
  %899 = vmatpush1.bf16.msra.mxu0 0
  %900 = vmatprep.mubr.bf16.mxu0 0
  %901 = vmatmul.mubr.bf16.gmra.mrb[0].mxu0 %v825
  %v902 = vpop.f32.mrb[0].mxu0
  %v903 = vadd.f32 0.0, %v902
  %v904 = vpop.f32.mrb[0].mxu0
  %v905 = vadd.f32 0.0, %v904
  %v906 = vpop.f32.mrb[0].mxu0
  %v907 = vpop.f32.mrb[0].mxu0
  %908 = vdwg.mxu0
  %909 = vmatprep.subr.bf16.mxu0 %v793
  %910 = vmatpush1.bf16.msra.mxu0 %v792
  %911 = vmatprep.subr.bf16.mxu0 %v802
  %912 = vmatpush1.bf16.msra.mxu0 %v801
  %913 = vmatprep.subr.bf16.mxu0 %v811
  %914 = vmatpush1.bf16.msra.mxu0 %v810
  %915 = vmatprep.subr.bf16.mxu0 %v820
  %916 = vmatpush1.bf16.msra.mxu0 %v819
  %917 = vmatprep.subr.bf16.mxu0 0
  %918 = vmatpush1.bf16.msra.mxu0 0
  %919 = vmatprep.subr.bf16.mxu0 0
  %920 = vmatpush1.bf16.msra.mxu0 0
  %921 = vmatprep.subr.bf16.mxu0 0
  %922 = vmatpush1.bf16.msra.mxu0 0
  %923 = vmatprep.subr.bf16.mxu0 0
  %924 = vmatpush1.bf16.msra.mxu0 0
  %925 = vmatprep.subr.bf16.mxu0 0
  %926 = vmatpush1.bf16.msra.mxu0 0
  %927 = vmatprep.subr.bf16.mxu0 0
  %928 = vmatpush1.bf16.msra.mxu0 0
  %929 = vmatprep.subr.bf16.mxu0 0
  %930 = vmatpush1.bf16.msra.mxu0 0
  %931 = vmatprep.subr.bf16.mxu0 0
  %932 = vmatpush1.bf16.msra.mxu0 0
  %933 = vmatprep.subr.bf16.mxu0 0
  %934 = vmatpush1.bf16.msra.mxu0 0
  %935 = vmatprep.subr.bf16.mxu0 0
  %936 = vmatpush1.bf16.msra.mxu0 0
  %937 = vmatprep.subr.bf16.mxu0 0
  %938 = vmatpush1.bf16.msra.mxu0 0
  %939 = vmatprep.subr.bf16.mxu0 0
  %940 = vmatpush1.bf16.msra.mxu0 0
  %941 = vmatprep.mubr.bf16.mxu0 0
  %942 = vmatmul.mubr.bf16.gmra.mrb[0].mxu0 %v825
  %v943 = vpop.f32.mrb[0].mxu0
  %v944 = vadd.f32 0.0, %v943
  %v945 = vpop.f32.mrb[0].mxu0
  %v946 = vadd.f32 0.0, %v945
  %v947 = vpop.f32.mrb[0].mxu0
  %v948 = vpop.f32.mrb[0].mxu0
  %949 = vdwg.mxu0
  %950 = vmatprep.subr.bf16.mxu0 %v795
  %951 = vmatpush1.bf16.msra.mxu0 %v794
  %952 = vmatprep.subr.bf16.mxu0 %v804
  %953 = vmatpush1.bf16.msra.mxu0 %v803
  %954 = vmatprep.subr.bf16.mxu0 %v813
  %955 = vmatpush1.bf16.msra.mxu0 %v812
  %956 = vmatprep.subr.bf16.mxu0 %v822
  %957 = vmatpush1.bf16.msra.mxu0 %v821
  %958 = vmatprep.subr.bf16.mxu0 0
  %959 = vmatpush1.bf16.msra.mxu0 0
  %960 = vmatprep.subr.bf16.mxu0 0
  %961 = vmatpush1.bf16.msra.mxu0 0
  %962 = vmatprep.subr.bf16.mxu0 0
  %963 = vmatpush1.bf16.msra.mxu0 0
  %964 = vmatprep.subr.bf16.mxu0 0
  %965 = vmatpush1.bf16.msra.mxu0 0
  %966 = vmatprep.subr.bf16.mxu0 0
  %967 = vmatpush1.bf16.msra.mxu0 0
  %968 = vmatprep.subr.bf16.mxu0 0
  %969 = vmatpush1.bf16.msra.mxu0 0
  %970 = vmatprep.subr.bf16.mxu0 0
  %971 = vmatpush1.bf16.msra.mxu0 0
  %972 = vmatprep.subr.bf16.mxu0 0
  %973 = vmatpush1.bf16.msra.mxu0 0
  %974 = vmatprep.subr.bf16.mxu0 0
  %975 = vmatpush1.bf16.msra.mxu0 0
  %976 = vmatprep.subr.bf16.mxu0 0
  %977 = vmatpush1.bf16.msra.mxu0 0
  %978 = vmatprep.subr.bf16.mxu0 0
  %979 = vmatpush1.bf16.msra.mxu0 0
  %980 = vmatprep.subr.bf16.mxu0 0
  %981 = vmatpush1.bf16.msra.mxu0 0
  %982 = vmatprep.mubr.bf16.mxu0 0
  %983 = vmatmul.mubr.bf16.gmra.mrb[0].mxu0 %v825
  %v984 = vpop.f32.mrb[0].mxu0
  %v985 = vadd.f32 0.0, %v984
  %v986 = vpop.f32.mrb[0].mxu0
  %v987 = vadd.f32 0.0, %v986
  %v988 = vpop.f32.mrb[0].mxu0
  %v989 = vpop.f32.mrb[0].mxu0
  %990 = vdwg.mxu0
  %991 = vmatprep.subr.bf16.mxu0 0
  %992 = vmatpush1.bf16.msra.mxu0 %v796
  %993 = vmatprep.subr.bf16.mxu0 0
  %994 = vmatpush1.bf16.msra.mxu0 %v805
  %995 = vmatprep.subr.bf16.mxu0 0
  %996 = vmatpush1.bf16.msra.mxu0 %v814
  %997 = vmatprep.subr.bf16.mxu0 0
  %998 = vmatpush1.bf16.msra.mxu0 %v823
  %999 = vmatprep.subr.bf16.mxu0 0
  %1000 = vmatpush1.bf16.msra.mxu0 0
  %1001 = vmatprep.subr.bf16.mxu0 0
  %1002 = vmatpush1.bf16.msra.mxu0 0
  %1003 = vmatprep.subr.bf16.mxu0 0
  %1004 = vmatpush1.bf16.msra.mxu0 0
  %1005 = vmatprep.subr.bf16.mxu0 0
  %1006 = vmatpush1.bf16.msra.mxu0 0
  %1007 = vmatprep.subr.bf16.mxu0 0
  %1008 = vmatpush1.bf16.msra.mxu0 0
  %1009 = vmatprep.subr.bf16.mxu0 0
  %1010 = vmatpush1.bf16.msra.mxu0 0
  %1011 = vmatprep.subr.bf16.mxu0 0
  %1012 = vmatpush1.bf16.msra.mxu0 0
  %1013 = vmatprep.subr.bf16.mxu0 0
  %1014 = vmatpush1.bf16.msra.mxu0 0
  %1015 = vmatprep.subr.bf16.mxu0 0
  %1016 = vmatpush1.bf16.msra.mxu0 0
  %1017 = vmatprep.subr.bf16.mxu0 0
  %1018 = vmatpush1.bf16.msra.mxu0 0
  %1019 = vmatprep.subr.bf16.mxu0 0
  %1020 = vmatpush1.bf16.msra.mxu0 0
  %1021 = vmatprep.subr.bf16.mxu0 0
  %1022 = vmatpush1.bf16.msra.mxu0 0
  %1023 = vmatprep.mubr.bf16.mxu0 0
  %1024 = vmatmul.mubr.bf16.gmra.mrb[0].mxu0 %v825
  %v1025 = vpop.f32.mrb[0].mxu0
  %v1026 = vadd.f32 0.0, %v1025
  %v1027 = vpop.f32.mrb[0].mxu0
  %v1028 = vpop.f32.mrb[0].mxu0
  %v1029 = vpop.f32.mrb[0].mxu0
  %1030 = vdwg.mxu0
  %v1031 = vmax.f32 %v862, 0.0
  %v1032 = vmax.f32 %v864, 0.0
  %v1033 = vmax.f32 %v903, 0.0
  %v1034 = vmax.f32 %v905, 0.0
  %v1035 = vmax.f32 %v944, 0.0
  %v1036 = vmax.f32 %v946, 0.0
  %v1037 = vmax.f32 %v985, 0.0
  %v1038 = vmax.f32 %v987, 0.0
  %v1039 = vmax.f32 %v1026, 0.0
  %s1040 = scalar_lea.vmem %s1, 8
  %v1041 = vld [vmem:[%s1040] sm:$0xf]
  %1051 = vrot.lane.b32.xlu0 %v1031, 127
  %v1052 = vpop.permute.xlu0 %1051
  %1053 = vrot.lane.b32.xlu0 %v1032, 127
  %v1054 = vpop.permute.xlu0 %1053
  %1055 = vrot.lane.b32.xlu0 %v1033, 127
  %v1056 = vpop.permute.xlu0 %1055
  %1057 = vrot.lane.b32.xlu0 %v1034, 127
  %v1058 = vpop.permute.xlu0 %1057
  %1059 = vrot.lane.b32.xlu0 %v1035, 127
  %v1060 = vpop.permute.xlu0 %1059
  %1061 = vrot.lane.b32.xlu0 %v1036, 127
  %v1062 = vpop.permute.xlu0 %1061
  %1063 = vrot.lane.b32.xlu0 %v1037, 127
  %v1064 = vpop.permute.xlu0 %1063
  %1065 = vrot.lane.b32.xlu0 %v1038, 127
  %v1066 = vpop.permute.xlu0 %1065
  %1067 = vrot.lane.b32.xlu0 %v1039, 127
  %v1068 = vpop.permute.xlu0 %1067
  %v1069 = vsel %vm63, %v1052, %v1054
  %v1070 = vsel %vm63, %v1054, %v1056
  %v1071 = vsel %vm63, %v1056, %v1058
  %v1072 = vsel %vm63, %v1058, %v1060
  %v1073 = vsel %vm63, %v1060, %v1062
  %v1074 = vsel %vm63, %v1062, %v1064
  %v1075 = vsel %vm63, %v1064, %v1066
  %v1076 = vsel %vm63, %v1066, %v1068
  %1085 = vrot.lane.b32.xlu0 %v1031, 126
  %v1086 = vpop.permute.xlu0 %1085
  %1087 = vrot.lane.b32.xlu0 %v1032, 126
  %v1088 = vpop.permute.xlu0 %1087
  %1089 = vrot.lane.b32.xlu0 %v1033, 126
  %v1090 = vpop.permute.xlu0 %1089
  %1091 = vrot.lane.b32.xlu0 %v1034, 126
  %v1092 = vpop.permute.xlu0 %1091
  %1093 = vrot.lane.b32.xlu0 %v1035, 126
  %v1094 = vpop.permute.xlu0 %1093
  %1095 = vrot.lane.b32.xlu0 %v1036, 126
  %v1096 = vpop.permute.xlu0 %1095
  %1097 = vrot.lane.b32.xlu0 %v1037, 126
  %v1098 = vpop.permute.xlu0 %1097
  %1099 = vrot.lane.b32.xlu0 %v1038, 126
  %v1100 = vpop.permute.xlu0 %1099
  %1101 = vrot.lane.b32.xlu0 %v1039, 126
  %v1102 = vpop.permute.xlu0 %1101
  %v1103 = vsel %vm106, %v1086, %v1088
  %v1104 = vsel %vm106, %v1088, %v1090
  %v1105 = vsel %vm106, %v1090, %v1092
  %v1106 = vsel %vm106, %v1092, %v1094
  %v1107 = vsel %vm106, %v1094, %v1096
  %v1108 = vsel %vm106, %v1096, %v1098
  %v1109 = vsel %vm106, %v1098, %v1100
  %v1110 = vsel %vm106, %v1100, %v1102
  %1119 = vrot.lane.b32.xlu0 %v1031, 125
  %v1120 = vpop.permute.xlu0 %1119
  %1121 = vrot.lane.b32.xlu0 %v1032, 125
  %v1122 = vpop.permute.xlu0 %1121
  %1123 = vrot.lane.b32.xlu0 %v1033, 125
  %v1124 = vpop.permute.xlu0 %1123
  %1125 = vrot.lane.b32.xlu0 %v1034, 125
  %v1126 = vpop.permute.xlu0 %1125
  %1127 = vrot.lane.b32.xlu0 %v1035, 125
  %v1128 = vpop.permute.xlu0 %1127
  %1129 = vrot.lane.b32.xlu0 %v1036, 125
  %v1130 = vpop.permute.xlu0 %1129
  %1131 = vrot.lane.b32.xlu0 %v1037, 125
  %v1132 = vpop.permute.xlu0 %1131
  %1133 = vrot.lane.b32.xlu0 %v1038, 125
  %v1134 = vpop.permute.xlu0 %1133
  %1135 = vrot.lane.b32.xlu0 %v1039, 125
  %v1136 = vpop.permute.xlu0 %1135
  %v1137 = vsel %vm149, %v1120, %v1122
  %v1138 = vsel %vm149, %v1122, %v1124
  %v1139 = vsel %vm149, %v1124, %v1126
  %v1140 = vsel %vm149, %v1126, %v1128
  %v1141 = vsel %vm149, %v1128, %v1130
  %v1142 = vsel %vm149, %v1130, %v1132
  %v1143 = vsel %vm149, %v1132, %v1134
  %v1144 = vsel %vm149, %v1134, %v1136
  %1153 = vrot.lane.b32.xlu0 %v1031, 124
  %v1154 = vpop.permute.xlu0 %1153
  %1155 = vrot.lane.b32.xlu0 %v1032, 124
  %v1156 = vpop.permute.xlu0 %1155
  %1157 = vrot.lane.b32.xlu0 %v1033, 124
  %v1158 = vpop.permute.xlu0 %1157
  %1159 = vrot.lane.b32.xlu0 %v1034, 124
  %v1160 = vpop.permute.xlu0 %1159
  %1161 = vrot.lane.b32.xlu0 %v1035, 124
  %v1162 = vpop.permute.xlu0 %1161
  %1163 = vrot.lane.b32.xlu0 %v1036, 124
  %v1164 = vpop.permute.xlu0 %1163
  %1165 = vrot.lane.b32.xlu0 %v1037, 124
  %v1166 = vpop.permute.xlu0 %1165
  %1167 = vrot.lane.b32.xlu0 %v1038, 124
  %v1168 = vpop.permute.xlu0 %1167
  %1169 = vrot.lane.b32.xlu0 %v1039, 124
  %v1170 = vpop.permute.xlu0 %1169
  %v1171 = vsel %vm192, %v1154, %v1156
  %v1172 = vsel %vm192, %v1156, %v1158
  %v1173 = vsel %vm192, %v1158, %v1160
  %v1174 = vsel %vm192, %v1160, %v1162
  %v1175 = vsel %vm192, %v1162, %v1164
  %v1176 = vsel %vm192, %v1164, %v1166
  %v1177 = vsel %vm192, %v1166, %v1168
  %v1178 = vsel %vm192, %v1168, %v1170
  %1187 = vrot.lane.b32.xlu0 %v1031, 123
  %v1188 = vpop.permute.xlu0 %1187
  %1189 = vrot.lane.b32.xlu0 %v1032, 123
  %v1190 = vpop.permute.xlu0 %1189
  %1191 = vrot.lane.b32.xlu0 %v1033, 123
  %v1192 = vpop.permute.xlu0 %1191
  %1193 = vrot.lane.b32.xlu0 %v1034, 123
  %v1194 = vpop.permute.xlu0 %1193
  %1195 = vrot.lane.b32.xlu0 %v1035, 123
  %v1196 = vpop.permute.xlu0 %1195
  %1197 = vrot.lane.b32.xlu0 %v1036, 123
  %v1198 = vpop.permute.xlu0 %1197
  %1199 = vrot.lane.b32.xlu0 %v1037, 123
  %v1200 = vpop.permute.xlu0 %1199
  %1201 = vrot.lane.b32.xlu0 %v1038, 123
  %v1202 = vpop.permute.xlu0 %1201
  %1203 = vrot.lane.b32.xlu0 %v1039, 123
  %v1204 = vpop.permute.xlu0 %1203
  %v1205 = vsel %vm235, %v1188, %v1190
  %v1206 = vsel %vm235, %v1190, %v1192
  %v1207 = vsel %vm235, %v1192, %v1194
  %v1208 = vsel %vm235, %v1194, %v1196
  %v1209 = vsel %vm235, %v1196, %v1198
  %v1210 = vsel %vm235, %v1198, %v1200
  %v1211 = vsel %vm235, %v1200, %v1202
  %v1212 = vsel %vm235, %v1202, %v1204
  %1221 = vrot.lane.b32.xlu0 %v1031, 122
  %v1222 = vpop.permute.xlu0 %1221
  %1223 = vrot.lane.b32.xlu0 %v1032, 122
  %v1224 = vpop.permute.xlu0 %1223
  %1225 = vrot.lane.b32.xlu0 %v1033, 122
  %v1226 = vpop.permute.xlu0 %1225
  %1227 = vrot.lane.b32.xlu0 %v1034, 122
  %v1228 = vpop.permute.xlu0 %1227
  %1229 = vrot.lane.b32.xlu0 %v1035, 122
  %v1230 = vpop.permute.xlu0 %1229
  %1231 = vrot.lane.b32.xlu0 %v1036, 122
  %v1232 = vpop.permute.xlu0 %1231
  %1233 = vrot.lane.b32.xlu0 %v1037, 122
  %v1234 = vpop.permute.xlu0 %1233
  %1235 = vrot.lane.b32.xlu0 %v1038, 122
  %v1236 = vpop.permute.xlu0 %1235
  %1237 = vrot.lane.b32.xlu0 %v1039, 122
  %v1238 = vpop.permute.xlu0 %1237
  %v1239 = vsel %vm278, %v1222, %v1224
  %v1240 = vsel %vm278, %v1224, %v1226
  %v1241 = vsel %vm278, %v1226, %v1228
  %v1242 = vsel %vm278, %v1228, %v1230
  %v1243 = vsel %vm278, %v1230, %v1232
  %v1244 = vsel %vm278, %v1232, %v1234
  %v1245 = vsel %vm278, %v1234, %v1236
  %v1246 = vsel %vm278, %v1236, %v1238
  %v1255 = vpack.c.bf16 %v1069, %v1031
  %v1256 = vpack.c.bf16 %v1070, %v1032
  %v1257 = vpack.c.bf16 %v1071, %v1033
  %v1258 = vpack.c.bf16 %v1072, %v1034
  %v1259 = vpack.c.bf16 %v1073, %v1035
  %v1260 = vpack.c.bf16 %v1074, %v1036
  %v1261 = vpack.c.bf16 %v1075, %v1037
  %v1262 = vpack.c.bf16 %v1076, %v1038
  %v1263 = vpack.c.bf16 %v1137, %v1103
  %v1264 = vpack.c.bf16 %v1138, %v1104
  %v1265 = vpack.c.bf16 %v1139, %v1105
  %v1266 = vpack.c.bf16 %v1140, %v1106
  %v1267 = vpack.c.bf16 %v1141, %v1107
  %v1268 = vpack.c.bf16 %v1142, %v1108
  %v1269 = vpack.c.bf16 %v1143, %v1109
  %v1270 = vpack.c.bf16 %v1144, %v1110
  %v1271 = vpack.c.bf16 %v1205, %v1171
  %v1272 = vpack.c.bf16 %v1206, %v1172
  %v1273 = vpack.c.bf16 %v1207, %v1173
  %v1274 = vpack.c.bf16 %v1208, %v1174
  %v1275 = vpack.c.bf16 %v1209, %v1175
  %v1276 = vpack.c.bf16 %v1210, %v1176
  %v1277 = vpack.c.bf16 %v1211, %v1177
  %v1278 = vpack.c.bf16 %v1212, %v1178
  %v1279 = vpack.c.bf16 %v1031, %v1239
  %v1280 = vpack.c.bf16 %v1032, %v1240
  %v1281 = vpack.c.bf16 %v1033, %v1241
  %v1282 = vpack.c.bf16 %v1034, %v1242
  %v1283 = vpack.c.bf16 %v1035, %v1243
  %v1284 = vpack.c.bf16 %v1036, %v1244
  %v1285 = vpack.c.bf16 %v1037, %v1245
  %v1286 = vpack.c.bf16 %v1038, %v1246
  %v1288 = vsel %vm339, %v1041, 0
  %1290 = vmatprep.subr.bf16.mxu0 %v1256
  %1291 = vmatpush1.bf16.msra.mxu0 %v1255
  %1292 = vmatprep.subr.bf16.mxu0 %v1264
  %1293 = vmatpush1.bf16.msra.mxu0 %v1263
  %1294 = vmatprep.subr.bf16.mxu0 %v1272
  %1295 = vmatpush1.bf16.msra.mxu0 %v1271
  %1296 = vmatprep.subr.bf16.mxu0 %v1280
  %1297 = vmatpush1.bf16.msra.mxu0 %v1279
  %1298 = vmatprep.subr.bf16.mxu0 0
  %1299 = vmatpush1.bf16.msra.mxu0 0
  %1300 = vmatprep.subr.bf16.mxu0 0
  %1301 = vmatpush1.bf16.msra.mxu0 0
  %1302 = vmatprep.subr.bf16.mxu0 0
  %1303 = vmatpush1.bf16.msra.mxu0 0
  %1304 = vmatprep.subr.bf16.mxu0 0
  %1305 = vmatpush1.bf16.msra.mxu0 0
  %1306 = vmatprep.subr.bf16.mxu0 0
  %1307 = vmatpush1.bf16.msra.mxu0 0
  %1308 = vmatprep.subr.bf16.mxu0 0
  %1309 = vmatpush1.bf16.msra.mxu0 0
  %1310 = vmatprep.subr.bf16.mxu0 0
  %1311 = vmatpush1.bf16.msra.mxu0 0
  %1312 = vmatprep.subr.bf16.mxu0 0
  %1313 = vmatpush1.bf16.msra.mxu0 0
  %1314 = vmatprep.subr.bf16.mxu0 0
  %1315 = vmatpush1.bf16.msra.mxu0 0
  %1316 = vmatprep.subr.bf16.mxu0 0
  %1317 = vmatpush1.bf16.msra.mxu0 0
  %1318 = vmatprep.subr.bf16.mxu0 0
  %1319 = vmatpush1.bf16.msra.mxu0 0
  %1320 = vmatprep.subr.bf16.mxu0 0
  %1321 = vmatpush1.bf16.msra.mxu0 0
  %1322 = vmatprep.mubr.bf16.mxu0 0
  %1323 = vmatmul.mubr.bf16.gmra.mrb[0].mxu0 %v1288
  %v1324 = vpop.f32.mrb[0].mxu0
  %v1325 = vadd.f32 0.0, %v1324
  %v1326 = vpop.f32.mrb[0].mxu0
  %v1327 = vadd.f32 0.0, %v1326
  %v1328 = vpop.f32.mrb[0].mxu0
  %v1329 = vpop.f32.mrb[0].mxu0
  %1330 = vdwg.mxu0
  %1331 = vmatprep.subr.bf16.mxu0 %v1258
  %1332 = vmatpush1.bf16.msra.mxu0 %v1257
  %1333 = vmatprep.subr.bf16.mxu0 %v1266
  %1334 = vmatpush1.bf16.msra.mxu0 %v1265
  %1335 = vmatprep.subr.bf16.mxu0 %v1274
  %1336 = vmatpush1.bf16.msra.mxu0 %v1273
  %1337 = vmatprep.subr.bf16.mxu0 %v1282
  %1338 = vmatpush1.bf16.msra.mxu0 %v1281
  %1339 = vmatprep.subr.bf16.mxu0 0
  %1340 = vmatpush1.bf16.msra.mxu0 0
  %1341 = vmatprep.subr.bf16.mxu0 0
  %1342 = vmatpush1.bf16.msra.mxu0 0
  %1343 = vmatprep.subr.bf16.mxu0 0
  %1344 = vmatpush1.bf16.msra.mxu0 0
  %1345 = vmatprep.subr.bf16.mxu0 0
  %1346 = vmatpush1.bf16.msra.mxu0 0
  %1347 = vmatprep.subr.bf16.mxu0 0
  %1348 = vmatpush1.bf16.msra.mxu0 0
  %1349 = vmatprep.subr.bf16.mxu0 0
  %1350 = vmatpush1.bf16.msra.mxu0 0
  %1351 = vmatprep.subr.bf16.mxu0 0
  %1352 = vmatpush1.bf16.msra.mxu0 0
  %1353 = vmatprep.subr.bf16.mxu0 0
  %1354 = vmatpush1.bf16.msra.mxu0 0
  %1355 = vmatprep.subr.bf16.mxu0 0
  %1356 = vmatpush1.bf16.msra.mxu0 0
  %1357 = vmatprep.subr.bf16.mxu0 0
  %1358 = vmatpush1.bf16.msra.mxu0 0
  %1359 = vmatprep.subr.bf16.mxu0 0
  %1360 = vmatpush1.bf16.msra.mxu0 0
  %1361 = vmatprep.subr.bf16.mxu0 0
  %1362 = vmatpush1.bf16.msra.mxu0 0
  %1363 = vmatprep.mubr.bf16.mxu0 0
  %1364 = vmatmul.mubr.bf16.gmra.mrb[0].mxu0 %v1288
  %v1365 = vpop.f32.mrb[0].mxu0
  %v1366 = vadd.f32 0.0, %v1365
  %v1367 = vpop.f32.mrb[0].mxu0
  %v1368 = vadd.f32 0.0, %v1367
  %v1369 = vpop.f32.mrb[0].mxu0
  %v1370 = vpop.f32.mrb[0].mxu0
  %1371 = vdwg.mxu0
  %1372 = vmatprep.subr.bf16.mxu0 %v1260
  %1373 = vmatpush1.bf16.msra.mxu0 %v1259
  %1374 = vmatprep.subr.bf16.mxu0 %v1268
  %1375 = vmatpush1.bf16.msra.mxu0 %v1267
  %1376 = vmatprep.subr.bf16.mxu0 %v1276
  %1377 = vmatpush1.bf16.msra.mxu0 %v1275
  %1378 = vmatprep.subr.bf16.mxu0 %v1284
  %1379 = vmatpush1.bf16.msra.mxu0 %v1283
  %1380 = vmatprep.subr.bf16.mxu0 0
  %1381 = vmatpush1.bf16.msra.mxu0 0
  %1382 = vmatprep.subr.bf16.mxu0 0
  %1383 = vmatpush1.bf16.msra.mxu0 0
  %1384 = vmatprep.subr.bf16.mxu0 0
  %1385 = vmatpush1.bf16.msra.mxu0 0
  %1386 = vmatprep.subr.bf16.mxu0 0
  %1387 = vmatpush1.bf16.msra.mxu0 0
  %1388 = vmatprep.subr.bf16.mxu0 0
  %1389 = vmatpush1.bf16.msra.mxu0 0
  %1390 = vmatprep.subr.bf16.mxu0 0
  %1391 = vmatpush1.bf16.msra.mxu0 0
  %1392 = vmatprep.subr.bf16.mxu0 0
  %1393 = vmatpush1.bf16.msra.mxu0 0
  %1394 = vmatprep.subr.bf16.mxu0 0
  %1395 = vmatpush1.bf16.msra.mxu0 0
  %1396 = vmatprep.subr.bf16.mxu0 0
  %1397 = vmatpush1.bf16.msra.mxu0 0
  %1398 = vmatprep.subr.bf16.mxu0 0
  %1399 = vmatpush1.bf16.msra.mxu0 0
  %1400 = vmatprep.subr.bf16.mxu0 0
  %1401 = vmatpush1.bf16.msra.mxu0 0
  %1402 = vmatprep.subr.bf16.mxu0 0
  %1403 = vmatpush1.bf16.msra.mxu0 0
  %1404 = vmatprep.mubr.bf16.mxu0 0
  %1405 = vmatmul.mubr.bf16.gmra.mrb[0].mxu0 %v1288
  %v1406 = vpop.f32.mrb[0].mxu0
  %v1407 = vadd.f32 0.0, %v1406
  %v1408 = vpop.f32.mrb[0].mxu0
  %v1409 = vadd.f32 0.0, %v1408
  %v1410 = vpop.f32.mrb[0].mxu0
  %v1411 = vpop.f32.mrb[0].mxu0
  %1412 = vdwg.mxu0
  %1413 = vmatprep.subr.bf16.mxu0 %v1262
  %1414 = vmatpush1.bf16.msra.mxu0 %v1261
  %1415 = vmatprep.subr.bf16.mxu0 %v1270
  %1416 = vmatpush1.bf16.msra.mxu0 %v1269
  %1417 = vmatprep.subr.bf16.mxu0 %v1278
  %1418 = vmatpush1.bf16.msra.mxu0 %v1277
  %1419 = vmatprep.subr.bf16.mxu0 %v1286
  %1420 = vmatpush1.bf16.msra.mxu0 %v1285
  %1421 = vmatprep.subr.bf16.mxu0 0
  %1422 = vmatpush1.bf16.msra.mxu0 0
  %1423 = vmatprep.subr.bf16.mxu0 0
  %1424 = vmatpush1.bf16.msra.mxu0 0
  %1425 = vmatprep.subr.bf16.mxu0 0
  %1426 = vmatpush1.bf16.msra.mxu0 0
  %1427 = vmatprep.subr.bf16.mxu0 0
  %1428 = vmatpush1.bf16.msra.mxu0 0
  %1429 = vmatprep.subr.bf16.mxu0 0
  %1430 = vmatpush1.bf16.msra.mxu0 0
  %1431 = vmatprep.subr.bf16.mxu0 0
  %1432 = vmatpush1.bf16.msra.mxu0 0
  %1433 = vmatprep.subr.bf16.mxu0 0
  %1434 = vmatpush1.bf16.msra.mxu0 0
  %1435 = vmatprep.subr.bf16.mxu0 0
  %1436 = vmatpush1.bf16.msra.mxu0 0
  %1437 = vmatprep.subr.bf16.mxu0 0
  %1438 = vmatpush1.bf16.msra.mxu0 0
  %1439 = vmatprep.subr.bf16.mxu0 0
  %1440 = vmatpush1.bf16.msra.mxu0 0
  %1441 = vmatprep.subr.bf16.mxu0 0
  %1442 = vmatpush1.bf16.msra.mxu0 0
  %1443 = vmatprep.subr.bf16.mxu0 0
  %1444 = vmatpush1.bf16.msra.mxu0 0
  %1445 = vmatprep.mubr.bf16.mxu0 0
  %1446 = vmatmul.mubr.bf16.gmra.mrb[0].mxu0 %v1288
  %v1447 = vpop.f32.mrb[0].mxu0
  %v1448 = vadd.f32 0.0, %v1447
  %v1449 = vpop.f32.mrb[0].mxu0
  %v1450 = vadd.f32 0.0, %v1449
  %v1451 = vpop.f32.mrb[0].mxu0
  %v1452 = vpop.f32.mrb[0].mxu0
  %1453 = vdwg.mxu0
  %v1454 = vmax.f32 %v1325, 0.0
  %v1455 = vmax.f32 %v1327, 0.0
  %v1456 = vmax.f32 %v1366, 0.0
  %v1457 = vmax.f32 %v1368, 0.0
  %v1458 = vmax.f32 %v1407, 0.0
  %v1459 = vmax.f32 %v1409, 0.0
  %v1460 = vmax.f32 %v1448, 0.0
  %v1461 = vmax.f32 %v1450, 0.0
  %v1462 = vpack.c.bf16 %v1458, %v1454
  %v1463 = vpack.c.bf16 %v1459, %v1455
  %v1464 = vpack.c.bf16 %v1460, %v1456
  %v1465 = vpack.c.bf16 %v1461, %v1457
  %v1466 = vld [vmem:[%s2] sm:$0xf]
  %v1467 = vld [vmem:[%s2 + $0x4] sm:$0xf]
  %v1468 = vld [vmem:[%s2 + $0x8] sm:$0xf]
  %v1469 = vld [vmem:[%s2 + $0xc] sm:$0xf]
  %v1470 = vld [vmem:[%s2 + $0x10] sm:$0xf]
  %v1471 = vld [vmem:[%s2 + $0x14] sm:$0xf]
  %v1472 = vld [vmem:[%s2 + $0x18] sm:$0xf]
  %v1473 = vld [vmem:[%s2 + $0x1c] sm:$0xf]
  %v1474 = vld [vmem:[%s2 + $0x20] sm:$0xf]
  %v1475 = vld [vmem:[%s2 + $0x24] sm:$0xf]
  %v1476 = vld [vmem:[%s2 + $0x28] sm:$0xf]
  %v1477 = vld [vmem:[%s2 + $0x2c] sm:$0xf]
  %v1478 = vld [vmem:[%s2 + $0x30] sm:$0xf]
  %v1479 = vld [vmem:[%s2 + $0x34] sm:$0xf]
  %v1480 = vld [vmem:[%s2 + $0x38] sm:$0xf]
  %v1481 = vld [vmem:[%s2 + $0x3c] sm:$0xf]
  %v1482 = vld [vmem:[%s2 + $0x40] sm:$0xf]
  %v1483 = vld [vmem:[%s2 + $0x44] sm:$0xf]
  %v1484 = vld [vmem:[%s2 + $0x48] sm:$0xf]
  %v1485 = vld [vmem:[%s2 + $0x4c] sm:$0xf]
  %v1486 = vld [vmem:[%s2 + $0x50] sm:$0xf]
  %v1487 = vld [vmem:[%s2 + $0x54] sm:$0xf]
  %v1488 = vld [vmem:[%s2 + $0x58] sm:$0xf]
  %v1489 = vld [vmem:[%s2 + $0x5c] sm:$0xf]
  %v1490 = vld [vmem:[%s2 + $0x60] sm:$0xf]
  %v1491 = vld [vmem:[%s2 + $0x64] sm:$0xf]
  %v1492 = vld [vmem:[%s2 + $0x68] sm:$0xf]
  %v1493 = vld [vmem:[%s2 + $0x6c] sm:$0xf]
  %v1494 = vld [vmem:[%s2 + $0x70] sm:$0xf]
  %v1495 = vld [vmem:[%s2 + $0x74] sm:$0xf]
  %v1496 = vld [vmem:[%s2 + $0x78] sm:$0xf]
  %v1497 = vld [vmem:[%s2 + $0x7c] sm:$0xf]
  %v1498 = vld [vmem:[%s2 + $0x80] sm:$0xf]
  %v1499 = vld [vmem:[%s2 + $0x84] sm:$0xf]
  %v1500 = vld [vmem:[%s2 + $0x88] sm:$0xf]
  %v1501 = vld [vmem:[%s2 + $0x8c] sm:$0xf]
  %v1502 = vld [vmem:[%s2 + $0x90] sm:$0xf]
  %v1503 = vld [vmem:[%s2 + $0x94] sm:$0xf]
  %v1504 = vld [vmem:[%s2 + $0x98] sm:$0xf]
  %v1505 = vld [vmem:[%s2 + $0x9c] sm:$0xf]
  %v1506 = vld [vmem:[%s2 + $0xa0] sm:$0xf]
  %v1507 = vld [vmem:[%s2 + $0xa4] sm:$0xf]
  %v1508 = vld [vmem:[%s2 + $0xa8] sm:$0xf]
  %v1509 = vld [vmem:[%s2 + $0xac] sm:$0xf]
  %v1510 = vld [vmem:[%s2 + $0xb0] sm:$0xf]
  %v1511 = vld [vmem:[%s2 + $0xb4] sm:$0xf]
  %v1512 = vld [vmem:[%s2 + $0xb8] sm:$0xf]
  %v1513 = vld [vmem:[%s2 + $0xbc] sm:$0xf]
  %v1514 = vld [vmem:[%s2 + $0xc0] sm:$0xf]
  %v1515 = vld [vmem:[%s2 + $0xc4] sm:$0xf]
  %v1516 = vld [vmem:[%s2 + $0xc8] sm:$0xf]
  %v1517 = vld [vmem:[%s2 + $0xcc] sm:$0xf]
  %v1518 = vld [vmem:[%s2 + $0xd0] sm:$0xf]
  %v1519 = vld [vmem:[%s2 + $0xd4] sm:$0xf]
  %v1520 = vld [vmem:[%s2 + $0xd8] sm:$0xf]
  %v1521 = vld [vmem:[%s2 + $0xdc] sm:$0xf]
  %v1522 = vld [vmem:[%s2 + $0xe0] sm:$0xf]
  %v1523 = vld [vmem:[%s2 + $0xe4] sm:$0xf]
  %v1524 = vld [vmem:[%s2 + $0xe8] sm:$0xf]
  %v1525 = vld [vmem:[%s2 + $0xec] sm:$0xf]
  %v1526 = vld [vmem:[%s2 + $0xf0] sm:$0xf]
  %v1527 = vld [vmem:[%s2 + $0xf4] sm:$0xf]
  %v1528 = vld [vmem:[%s2 + $0xf8] sm:$0xf]
  %v1529 = vld [vmem:[%s2 + $0xfc] sm:$0xf]
  %v1594 = vunpack.c.l.b16 %v1466
  %v1595 = vunpack.c.l.b16 %v1467
  %v1596 = vunpack.c.l.b16 %v1468
  %v1597 = vunpack.c.l.b16 %v1469
  %v1598 = vunpack.c.l.b16 %v1470
  %v1599 = vunpack.c.l.b16 %v1471
  %v1600 = vunpack.c.l.b16 %v1472
  %v1601 = vunpack.c.l.b16 %v1473
  %v1602 = vunpack.c.l.b16 %v1474
  %v1603 = vunpack.c.l.b16 %v1475
  %v1604 = vunpack.c.l.b16 %v1476
  %v1605 = vunpack.c.l.b16 %v1477
  %v1606 = vunpack.c.l.b16 %v1478
  %v1607 = vunpack.c.l.b16 %v1479
  %v1608 = vunpack.c.l.b16 %v1480
  %v1609 = vunpack.c.l.b16 %v1481
  %v1610 = vunpack.c.l.b16 %v1482
  %v1611 = vunpack.c.l.b16 %v1483
  %v1612 = vunpack.c.l.b16 %v1484
  %v1613 = vunpack.c.l.b16 %v1485
  %v1614 = vunpack.c.l.b16 %v1486
  %v1615 = vunpack.c.l.b16 %v1487
  %v1616 = vunpack.c.l.b16 %v1488
  %v1617 = vunpack.c.l.b16 %v1489
  %v1618 = vunpack.c.l.b16 %v1490
  %v1619 = vunpack.c.l.b16 %v1491
  %v1620 = vunpack.c.l.b16 %v1492
  %v1621 = vunpack.c.l.b16 %v1493
  %v1622 = vunpack.c.l.b16 %v1494
  %v1623 = vunpack.c.l.b16 %v1495
  %v1624 = vunpack.c.l.b16 %v1496
  %v1625 = vunpack.c.l.b16 %v1497
  %v1626 = vunpack.c.l.b16 %v1498
  %v1627 = vunpack.c.l.b16 %v1499
  %v1628 = vunpack.c.l.b16 %v1500
  %v1629 = vunpack.c.l.b16 %v1501
  %v1630 = vunpack.c.l.b16 %v1502
  %v1631 = vunpack.c.l.b16 %v1503
  %v1632 = vunpack.c.l.b16 %v1504
  %v1633 = vunpack.c.l.b16 %v1505
  %v1634 = vunpack.c.l.b16 %v1506
  %v1635 = vunpack.c.l.b16 %v1507
  %v1636 = vunpack.c.l.b16 %v1508
  %v1637 = vunpack.c.l.b16 %v1509
  %v1638 = vunpack.c.l.b16 %v1510
  %v1639 = vunpack.c.l.b16 %v1511
  %v1640 = vunpack.c.l.b16 %v1512
  %v1641 = vunpack.c.l.b16 %v1513
  %v1642 = vunpack.c.l.b16 %v1514
  %v1643 = vunpack.c.l.b16 %v1515
  %v1644 = vunpack.c.l.b16 %v1516
  %v1645 = vunpack.c.l.b16 %v1517
  %v1646 = vunpack.c.l.b16 %v1518
  %v1647 = vunpack.c.l.b16 %v1519
  %v1648 = vunpack.c.l.b16 %v1520
  %v1649 = vunpack.c.l.b16 %v1521
  %v1650 = vunpack.c.l.b16 %v1522
  %v1651 = vunpack.c.l.b16 %v1523
  %v1652 = vunpack.c.l.b16 %v1524
  %v1653 = vunpack.c.l.b16 %v1525
  %v1654 = vunpack.c.l.b16 %v1526
  %v1655 = vunpack.c.l.b16 %v1527
  %v1656 = vunpack.c.l.b16 %v1528
  %v1657 = vunpack.c.l.b16 %v1529
  %v1658 = vpack.c.b16 %v1595, %v1594
  %v1659 = vpack.c.b16 %v1597, %v1596
  %v1660 = vpack.c.b16 %v1599, %v1598
  %v1661 = vpack.c.b16 %v1601, %v1600
  %v1662 = vpack.c.b16 %v1603, %v1602
  %v1663 = vpack.c.b16 %v1605, %v1604
  %v1664 = vpack.c.b16 %v1607, %v1606
  %v1665 = vpack.c.b16 %v1609, %v1608
  %v1666 = vpack.c.b16 %v1611, %v1610
  %v1667 = vpack.c.b16 %v1613, %v1612
  %v1668 = vpack.c.b16 %v1615, %v1614
  %v1669 = vpack.c.b16 %v1617, %v1616
  %v1670 = vpack.c.b16 %v1619, %v1618
  %v1671 = vpack.c.b16 %v1621, %v1620
  %v1672 = vpack.c.b16 %v1623, %v1622
  %v1673 = vpack.c.b16 %v1625, %v1624
  %v1674 = vpack.c.b16 %v1627, %v1626
  %v1675 = vpack.c.b16 %v1629, %v1628
  %v1676 = vpack.c.b16 %v1631, %v1630
  %v1677 = vpack.c.b16 %v1633, %v1632
  %v1678 = vpack.c.b16 %v1635, %v1634
  %v1679 = vpack.c.b16 %v1637, %v1636
  %v1680 = vpack.c.b16 %v1639, %v1638
  %v1681 = vpack.c.b16 %v1641, %v1640
  %v1682 = vpack.c.b16 %v1643, %v1642
  %v1683 = vpack.c.b16 %v1645, %v1644
  %v1684 = vpack.c.b16 %v1647, %v1646
  %v1685 = vpack.c.b16 %v1649, %v1648
  %v1686 = vpack.c.b16 %v1651, %v1650
  %v1687 = vpack.c.b16 %v1653, %v1652
  %v1688 = vpack.c.b16 %v1655, %v1654
  %v1689 = vpack.c.b16 %v1657, %v1656
  %1722 = vmatprep.subr.bf16.mxu0 0
  %1723 = vmatpush1.bf16.msra.mxu0 %v1658
  %1724 = vmatprep.subr.bf16.mxu0 0
  %1725 = vmatpush1.bf16.msra.mxu0 %v1659
  %1726 = vmatprep.subr.bf16.mxu0 0
  %1727 = vmatpush1.bf16.msra.mxu0 %v1660
  %1728 = vmatprep.subr.bf16.mxu0 0
  %1729 = vmatpush1.bf16.msra.mxu0 %v1661
  %1730 = vmatprep.subr.bf16.mxu0 0
  %1731 = vmatpush1.bf16.msra.mxu0 %v1662
  %1732 = vmatprep.subr.bf16.mxu0 0
  %1733 = vmatpush1.bf16.msra.mxu0 %v1663
  %1734 = vmatprep.subr.bf16.mxu0 0
  %1735 = vmatpush1.bf16.msra.mxu0 %v1664
  %1736 = vmatprep.subr.bf16.mxu0 0
  %1737 = vmatpush1.bf16.msra.mxu0 %v1665
  %1738 = vmatprep.subr.bf16.mxu0 0
  %1739 = vmatpush1.bf16.msra.mxu0 %v1666
  %1740 = vmatprep.subr.bf16.mxu0 0
  %1741 = vmatpush1.bf16.msra.mxu0 %v1667
  %1742 = vmatprep.subr.bf16.mxu0 0
  %1743 = vmatpush1.bf16.msra.mxu0 %v1668
  %1744 = vmatprep.subr.bf16.mxu0 0
  %1745 = vmatpush1.bf16.msra.mxu0 %v1669
  %1746 = vmatprep.subr.bf16.mxu0 0
  %1747 = vmatpush1.bf16.msra.mxu0 %v1670
  %1748 = vmatprep.subr.bf16.mxu0 0
  %1749 = vmatpush1.bf16.msra.mxu0 %v1671
  %1750 = vmatprep.subr.bf16.mxu0 0
  %1751 = vmatpush1.bf16.msra.mxu0 %v1672
  %1752 = vmatprep.subr.bf16.mxu0 0
  %1753 = vmatpush1.bf16.msra.mxu0 %v1673
  %1754 = vmatprep.mubr.bf16.mxu0 %v1463
  %1755 = vmatmul.mubr.bf16.gmra.mrb[0].mxu0 %v1462
  %v1756 = vpop.f32.mrb[0].mxu0
  %v1757 = vadd.f32 0.0, %v1756
  %v1758 = vpop.f32.mrb[0].mxu0
  %v1759 = vpop.f32.mrb[0].mxu0
  %v1760 = vadd.f32 0.0, %v1759
  %v1761 = vpop.f32.mrb[0].mxu0
  %1762 = vdwg.mxu0
  %1763 = vmatprep.subr.bf16.mxu0 0
  %1764 = vmatpush1.bf16.msra.mxu0 %v1674
  %1765 = vmatprep.subr.bf16.mxu0 0
  %1766 = vmatpush1.bf16.msra.mxu0 %v1675
  %1767 = vmatprep.subr.bf16.mxu0 0
  %1768 = vmatpush1.bf16.msra.mxu0 %v1676
  %1769 = vmatprep.subr.bf16.mxu0 0
  %1770 = vmatpush1.bf16.msra.mxu0 %v1677
  %1771 = vmatprep.subr.bf16.mxu0 0
  %1772 = vmatpush1.bf16.msra.mxu0 %v1678
  %1773 = vmatprep.subr.bf16.mxu0 0
  %1774 = vmatpush1.bf16.msra.mxu0 %v1679
  %1775 = vmatprep.subr.bf16.mxu0 0
  %1776 = vmatpush1.bf16.msra.mxu0 %v1680
  %1777 = vmatprep.subr.bf16.mxu0 0
  %1778 = vmatpush1.bf16.msra.mxu0 %v1681
  %1779 = vmatprep.subr.bf16.mxu0 0
  %1780 = vmatpush1.bf16.msra.mxu0 %v1682
  %1781 = vmatprep.subr.bf16.mxu0 0
  %1782 = vmatpush1.bf16.msra.mxu0 %v1683
  %1783 = vmatprep.subr.bf16.mxu0 0
  %1784 = vmatpush1.bf16.msra.mxu0 %v1684
  %1785 = vmatprep.subr.bf16.mxu0 0
  %1786 = vmatpush1.bf16.msra.mxu0 %v1685
  %1787 = vmatprep.subr.bf16.mxu0 0
  %1788 = vmatpush1.bf16.msra.mxu0 %v1686
  %1789 = vmatprep.subr.bf16.mxu0 0
  %1790 = vmatpush1.bf16.msra.mxu0 %v1687
  %1791 = vmatprep.subr.bf16.mxu0 0
  %1792 = vmatpush1.bf16.msra.mxu0 %v1688
  %1793 = vmatprep.subr.bf16.mxu0 0
  %1794 = vmatpush1.bf16.msra.mxu0 %v1689
  %1795 = vmatprep.mubr.bf16.mxu0 %v1465
  %1796 = vmatmul.mubr.bf16.gmra.mrb[0].mxu0 %v1464
  %v1797 = vpop.f32.mrb[0].mxu0
  %v1798 = vadd.f32 %v1757, %v1797
  %v1799 = vpop.f32.mrb[0].mxu0
  %v1800 = vpop.f32.mrb[0].mxu0
  %v1801 = vadd.f32 %v1760, %v1800
  %v1802 = vpop.f32.mrb[0].mxu0
  %1803 = vdwg.mxu0
  %v1804 = vld [vmem:[%s3] sm:$0xff]
  %v1805 = vld [vmem:[%s3 + $0x8] sm:$0xff]
  %v1806 = vld [vmem:[%s3 + $0x10] sm:$0xff]
  %v1807 = vld [vmem:[%s3 + $0x18] sm:$0xff]
  %v1808 = vld [vmem:[%s3 + $0x20] sm:$0xff]
  %v1809 = vmul.f32 %v1798, %v1804
  %v1810 = vmul.f32 %v1801, %v1805
  %v1811 = vrot.slane %v1809, 4
  %v1812 = vadd.f32 %v1809, %v1811
  %v1813 = vrot.slane %v1812, 2
  %v1814 = vadd.f32 %v1812, %v1813
  %v1815 = vrot.slane %v1814, 1
  %v1816 = vadd.f32 %v1814, %v1815
  %v1817 = vrot.slane %v1810, 4
  %v1818 = vadd.f32 %v1810, %v1817
  %v1819 = vrot.slane %v1818, 2
  %v1820 = vadd.f32 %v1818, %v1819
  %v1821 = vrot.slane %v1820, 1
  %v1822 = vadd.f32 %v1820, %v1821
  %vm1823 = vcmask 1040384
  %v1824 = vsel %vm1823, %v1816, %v1822
  %1825 = vrot.lane.b32.xlu0 %v1824, 64
  %v1826 = vpop.permute.xlu0 %1825
  %v1827 = vadd.f32 %v1824, %v1826
  %1828 = vrot.lane.b32.xlu0 %v1827, 32
  %v1829 = vpop.permute.xlu0 %1828
  %v1830 = vadd.f32 %v1827, %v1829
  %1831 = vrot.lane.b32.xlu0 %v1830, 16
  %v1832 = vpop.permute.xlu0 %1831
  %v1833 = vadd.f32 %v1830, %v1832
  %v1834 = vlaneseq
  %v1835 = vshrl.u32 %v1834, 7
  %v1836 = vsub.s32 1, %v1835
  %v1837 = vrot.slane %v1808, %v1836
  %v1838 = vadd.f32 %v1833, %v1837
  %v1839 = vmax.f32 %v1838, 0.0
  %v1840 = vlaneseq
  %v1841 = vshrl.u32 %v1840, 7
  %v1842 = vsub.s32 2, %v1841
  %v1843 = vrot.slane %v1808, %v1842
  %vm1844 = vcmask 130048
  %v1846 = vsel %vm1844, %v1839, 0
  %1848 = vmatprep.subr.mxu0 0.0
  %1849 = vmatpush1.msra.mxu0 %v1806
  %1850 = vmatprep.subr.mxu0 0.0
  %1851 = vmatpush1.msra.mxu0 %v1807
  %1852 = vmatprep.subr.mxu0 0.0
  %1853 = vmatpush1.msra.mxu0 0.0
  %1854 = vmatprep.subr.mxu0 0.0
  %1855 = vmatpush1.msra.mxu0 0.0
  %1856 = vmatprep.subr.mxu0 0.0
  %1857 = vmatpush1.msra.mxu0 0.0
  %1858 = vmatprep.subr.mxu0 0.0
  %1859 = vmatpush1.msra.mxu0 0.0
  %1860 = vmatprep.subr.mxu0 0.0
  %1861 = vmatpush1.msra.mxu0 0.0
  %1862 = vmatprep.subr.mxu0 0.0
  %1863 = vmatpush1.msra.mxu0 0.0
  %1864 = vmatprep.subr.mxu0 0.0
  %1865 = vmatpush1.msra.mxu0 0.0
  %1866 = vmatprep.subr.mxu0 0.0
  %1867 = vmatpush1.msra.mxu0 0.0
  %1868 = vmatprep.subr.mxu0 0.0
  %1869 = vmatpush1.msra.mxu0 0.0
  %1870 = vmatprep.subr.mxu0 0.0
  %1871 = vmatpush1.msra.mxu0 0.0
  %1872 = vmatprep.subr.mxu0 0.0
  %1873 = vmatpush1.msra.mxu0 0.0
  %1874 = vmatprep.subr.mxu0 0.0
  %1875 = vmatpush1.msra.mxu0 0.0
  %1876 = vmatprep.subr.mxu0 0.0
  %1877 = vmatpush1.msra.mxu0 0.0
  %1878 = vmatprep.subr.mxu0 0.0
  %1879 = vmatpush1.msra.mxu0 0.0
  %1880 = vmatprep.subr.mxu0 0.0
  %1881 = vmatpush1.msra.mxu0 0.0
  %1882 = vmatprep.subr.mxu0 0.0
  %1883 = vmatpush1.msra.mxu0 0.0
  %1884 = vmatprep.subr.mxu0 0.0
  %1885 = vmatpush1.msra.mxu0 0.0
  %1886 = vmatprep.subr.mxu0 0.0
  %1887 = vmatpush1.msra.mxu0 0.0
  %1888 = vmatprep.subr.mxu0 0.0
  %1889 = vmatpush1.msra.mxu0 0.0
  %1890 = vmatprep.subr.mxu0 0.0
  %1891 = vmatpush1.msra.mxu0 0.0
  %1892 = vmatprep.subr.mxu0 0.0
  %1893 = vmatpush1.msra.mxu0 0.0
  %1894 = vmatprep.subr.mxu0 0.0
  %1895 = vmatpush1.msra.mxu0 0.0
  %1896 = vmatprep.subr.mxu0 0.0
  %1897 = vmatpush1.msra.mxu0 0.0
  %1898 = vmatprep.subr.mxu0 0.0
  %1899 = vmatpush1.msra.mxu0 0.0
  %1900 = vmatprep.subr.mxu0 0.0
  %1901 = vmatpush1.msra.mxu0 0.0
  %1902 = vmatprep.subr.mxu0 0.0
  %1903 = vmatpush1.msra.mxu0 0.0
  %1904 = vmatprep.subr.mxu0 0.0
  %1905 = vmatpush1.msra.mxu0 0.0
  %1906 = vmatprep.subr.mxu0 0.0
  %1907 = vmatpush1.msra.mxu0 0.0
  %1908 = vmatprep.subr.mxu0 0.0
  %1909 = vmatpush1.msra.mxu0 0.0
  %1910 = vmatprep.subr.mxu0 0.0
  %1911 = vmatpush1.msra.mxu0 0.0
  %1912 = vmatprep.mubr.f32.mxu0 0.0
  %1913 = vmatmul.mubr.f32.gmra.mrb[0].mxu0 %v1846
  %v1914 = vpop.f32.mrb[0].mxu0
  %v1915 = vadd.f32 %v1843, %v1914
  %v1916 = vpop.f32.mrb[0].mxu0
  %1917 = vdwg.mxu0
  %v1918 = vmax.f32 %v1915, 0.0
  %v1919 = vlaneseq
  %v1920 = vshrl.u32 %v1919, 7
  %v1921 = vsub.s32 0, %v1920
  %v1922 = vrot.slane %v1808, %v1921
  %v1923 = vmul.f32 %v1918, %v1922
  %vm1924 = vcmask 517120
  %v1925 = vsel %vm1924, %v1923, 0.0
  %1926 = vadd.xlane.f32.xlu0 %v1925
  %v1927 = vpop.xlane.xlu0 %1926
  %v1928 = vlaneseq
  %v1929 = vshrl.u32 %v1928, 7
  %v1930 = vsub.s32 3, %v1929
  %v1931 = vrot.slane %v1808, %v1930
  %v1932 = vadd.f32 %v1927, %v1931
  %vm1933 = vcmask 1024
  %1934 = vst.msk [vmem:[%s4] sm:$0x3] %vm1933, %v1932
  // Predicated region
  $region18: #{cann_forward.1} parent=0 // pred_check
    _
  $region19: #{cann_forward.1} parent=0 // pred_check_branch
    %1936 = sbr.rel (0) target = $region21
  $region20: #{cann_forward.1} parent=0 // pred_region
    _
  $region21: #{cann_forward.1} parent=0 // pred_fallthru
    _
  // Predicated region
  $region22: #{cann_forward.1} parent=0 // pred_check
    _
  $region23: #{cann_forward.1} parent=0 // pred_check_branch
    %1938 = sbr.rel (0) target = $region25
  $region24: #{cann_forward.1} parent=0 // pred_region
    _
  $region25: #{cann_forward.1} parent=0 // pred_fallthru
    _

</llo_original>
